<compile_context>
chip_gen: v6e
topology: v6e:2x2x1
jax: 0.10.0
libtpu: 0.0.40
codegen_flags: <defaults>
</compile_context>

<pallas_src>
import jax
import jax.numpy as jnp
from jax import lax
from jax.experimental import pallas as pl
from jax.experimental.pallas import tpu as pltpu

_VMEM_LIMIT = 48 * 1024 * 1024  # above scoped defaults, below v7x physical


def _pick_row_tile(m, cap=2048):
    """Largest power-of-two row tile <= cap dividing m, leaving >= 2 blocks."""
    for t in (2048, 1024, 512, 256, 128, 64, 32, 16, 8):
        if t <= cap and t < m and m % t == 0:
            return t
    return m


# ---------------------------------------------------------------------------
# Stage 1: 1x1x1 conv (matmul) + folded-BN bias + ReLU, over row tiles.
# ---------------------------------------------------------------------------
def _stage1_kernel(x_ref, w_ref, b_ref, o_ref):
    acc = jnp.dot(x_ref[...], w_ref[...], preferred_element_type=jnp.float32)
    o_ref[...] = jnp.maximum(acc + b_ref[...], 0.0).astype(o_ref.dtype)


def _stage1(x2d, w1f, b1):
    m, cin = x2d.shape
    c1 = w1f.shape[1]
    tm = _pick_row_tile(m)
    return pl.pallas_call(
        _stage1_kernel,
        out_shape=jax.ShapeDtypeStruct((m, c1), x2d.dtype),
        grid=(m // tm,),
        in_specs=[pl.BlockSpec((tm, cin), lambda i: (i, 0)),
                  pl.BlockSpec((cin, c1), lambda i: (0, 0)),
                  pl.BlockSpec((1, c1), lambda i: (0, 0))],
        out_specs=pl.BlockSpec((tm, c1), lambda i: (i, 0)),
        compiler_params=pltpu.CompilerParams(
            dimension_semantics=("parallel",),
            vmem_limit_bytes=_VMEM_LIMIT),
    )(x2d, w1f, b1)


# ---------------------------------------------------------------------------
# Stage 2+3 fused: 3x3x3 conv (27 accumulated MXU matmuls, no HBM im2col)
#   + BN2 + ReLU + 1x1x1 conv (x4 expansion) + BN3 + residual + ReLU.
# Grid: (N, D, 3); the last axis is the depth tap (reduction, "arbitrary").
# y2 lives only in VMEM; HBM traffic = y1 (3x depth revisit) + residual +
# tiny weights + final lane-dense output.
# ---------------------------------------------------------------------------
def _stage23_kernel(y1p_ref, res_ref, w2_ref, b2_ref, w3_ref, b3_ref,
                    o_ref, acc_ref):
    kd = pl.program_id(2)
    hp2, wp2, c1 = y1p_ref.shape
    h, w = hp2 - 2, wp2 - 2

    @pl.when(kd == 0)
    def _init():
        acc_ref[...] = jnp.zeros_like(acc_ref)

    patch = y1p_ref[...]                      # (H+2, W+2, C1): one depth tap
    acc = acc_ref[...]
    for t in range(9):                        # static unroll over (kh, kw)
        kh, kw = divmod(t, 3)
        sub = patch[kh:kh + h, kw:kw + w, :].reshape(h * w, c1)
        acc = acc + jnp.dot(sub, w2_ref[t * c1:(t + 1) * c1, :],
                            preferred_element_type=jnp.float32)
    acc_ref[...] = acc

    @pl.when(kd == pl.num_programs(2) - 1)
    def _finish():
        y2 = jnp.maximum(acc_ref[...] + b2_ref[...], 0.0)        # BN2 + ReLU
        out = jnp.dot(y2, w3_ref[...], preferred_element_type=jnp.float32)
        out = out + b3_ref[...] + res_ref[...].astype(jnp.float32)
        o_ref[...] = jnp.maximum(out, 0.0).astype(o_ref.dtype)   # +res, ReLU


def _stage23(y1, x_res, w2f, b2, w3f, b3):
    n, d, h, w, c1 = y1.shape
    cexp = w3f.shape[1]
    # 1-voxel zero pad in D/H/W so every 3x3x3 tap indexes in-bounds
    # (cheap compared to the 27x im2col tensor it replaces).
    y1p = jnp.pad(y1, ((0, 0), (1, 1), (1, 1), (1, 1), (0, 0)))
    out = pl.pallas_call(
        _stage23_kernel,
        out_shape=jax.ShapeDtypeStruct((n, d, h * w, cexp), x_res.dtype),
        grid=(n, d, 3),
        in_specs=[
            # shifted depth slice of padded y1, selected by the kd grid axis
            pl.BlockSpec((None, None, h + 2, w + 2, c1),
                         lambda ni, di, kd: (ni, di + kd, 0, 0, 0)),
            # residual slab (constant across kd -> DMA'd once per (n, d))
            pl.BlockSpec((None, None, h * w, cexp),
                         lambda ni, di, kd: (ni, di, 0, 0)),
            # conv2 weight slab for this depth tap: (9*C1, C1)
            pl.BlockSpec((None, 9 * c1, c1), lambda ni, di, kd: (kd, 0, 0)),
            pl.BlockSpec((1, c1), lambda ni, di, kd: (0, 0)),
            pl.BlockSpec((c1, cexp), lambda ni, di, kd: (0, 0)),
            pl.BlockSpec((1, cexp), lambda ni, di, kd: (0, 0)),
        ],
        out_specs=pl.BlockSpec((None, None, h * w, cexp),
                               lambda ni, di, kd: (ni, di, 0, 0)),
        scratch_shapes=[pltpu.VMEM((h * w, c1), jnp.float32)],
        compiler_params=pltpu.CompilerParams(
            dimension_semantics=("parallel", "parallel", "arbitrary"),
            vmem_limit_bytes=_VMEM_LIMIT),
    )(y1p, x_res, w2f, b2, w3f, b3)
    return out.reshape(n, d, h, w, cexp)


# ---------------------------------------------------------------------------
# Bottleneck forward (stride=1, downsample=None), NDHWC layout
# ---------------------------------------------------------------------------
def bottleneck_forward(x_ndhwc, params):
    n, d, h, w, cin = x_ndhwc.shape
    c1 = params["w1f"].shape[1]
    cexp = params["w3f"].shape[1]
    assert cin == cexp, "identity residual requires inplanes == planes*expansion"
    m = n * d * h * w

    # conv1 (1x1x1) + BN1 + ReLU
    y1 = _stage1(x_ndhwc.reshape(m, cin), params["w1f"], params["b1"])
    y1 = y1.reshape(n, d, h, w, c1)

    # conv2 (3x3x3) + BN2 + ReLU + conv3 (1x1x1 x4) + BN3 + residual + ReLU
    x_res = x_ndhwc.reshape(n, d, h * w, cin)
    return _stage23(y1, x_res, params["w2f"], params["b2"],
                    params["w3f"], params["b3"])


# ---------------------------------------------------------------------------
# Deterministic parameter construction (eval-mode BN folded into weights/bias)
# ---------------------------------------------------------------------------
def _bn_scale_bias(key, c, eps=1e-5):
    k1, k2, k3, k4 = jax.random.split(key, 4)
    gamma = jax.random.uniform(k1, (c,), minval=0.5, maxval=1.5)
    beta = jax.random.normal(k2, (c,)) * 0.1
    rmean = jax.random.normal(k3, (c,)) * 0.1
    rvar = jax.random.uniform(k4, (c,), minval=0.5, maxval=1.5)
    scale = gamma / jnp.sqrt(rvar + eps)
    bias = beta - rmean * scale
    return (scale.reshape(1, c).astype(jnp.float32),
            bias.reshape(1, c).astype(jnp.float32))


def make_params(key, inplanes, planes, expansion=4):
    ks = jax.random.split(key, 6)
    c1, cexp = planes, planes * expansion
    w1 = (jax.random.normal(ks[0], (inplanes, c1)) * 0.1).astype(jnp.float32)
    w2_dhwio = (jax.random.normal(ks[1], (3, 3, 3, c1, c1)) * 0.1
                ).astype(jnp.float32)                       # (kd,kh,kw,cin,cout)
    w3 = (jax.random.normal(ks[2], (c1, cexp)) * 0.1).astype(jnp.float32)
    s1, b1 = _bn_scale_bias(ks[3], c1)
    s2, b2 = _bn_scale_bias(ks[4], c1)
    s3, b3 = _bn_scale_bias(ks[5], cexp)
    # Fold BN scales into the conv weights (kernel epilogue is bias-only).
    w1f = w1 * s1[0]
    w2f = (w2_dhwio * s2[0]).reshape(3, 9 * c1, c1)   # per depth-tap slabs
    w3f = w3 * s3[0]
    return dict(w1f=w1f, w2f=w2f, w3f=w3f, b1=b1, b2=b2, b3=b3,
                # raw (unfolded) copies kept only for the pure-JAX reference
                w1=w1, w2_dhwio=w2_dhwio, w3=w3, s1=s1, s2=s2, s3=s3)


# ---------------------------------------------------------------------------
# Pure-JAX reference (lax conv for the 3x3x3 stage) for validation
# ---------------------------------------------------------------------------
def reference_forward(x_ndhwc, p):
    y = jnp.einsum("ndhwc,co->ndhwo", x_ndhwc, p["w1"])
    y = jnp.maximum(y * p["s1"][0] + p["b1"][0], 0.0)
    y = lax.conv_general_dilated(
        y, p["w2_dhwio"], window_strides=(1, 1, 1), padding="SAME",
        dimension_numbers=("NDHWC", "DHWIO", "NDHWC"))
    y = jnp.maximum(y * p["s2"][0] + p["b2"][0], 0.0)
    y = jnp.einsum("ndhwc,co->ndhwo", y, p["w3"])
    y = y * p["s3"][0] + p["b3"][0] + x_ndhwc
    return jnp.maximum(y, 0.0)


if __name__ == "__main__":
    key = jax.random.PRNGKey(0)
    k_x, k_p = jax.random.split(key)

    # small shapes consistent with the module
    N, D, H, W = 2, 4, 8, 8
    planes, expansion = 4, 4
    inplanes = planes * expansion        # identity residual valid

    # PyTorch-style NCDHW input, transposed once to the kernel's NDHWC layout
    x_ncdhw = jax.random.normal(k_x, (N, inplanes, D, H, W), dtype=jnp.float32)
    x_ndhwc = jnp.transpose(x_ncdhw, (0, 2, 3, 4, 1))

    params = make_params(k_p, inplanes, planes, expansion)

    fwd = jax.jit(bottleneck_forward)
    out = jax.block_until_ready(fwd(x_ndhwc, params))
    ref = jax.block_until_ready(reference_forward(x_ndhwc, params))

    assert out.shape == (N, D, H, W, planes * expansion)
    assert jnp.allclose(out, ref, rtol=1e-3, atol=1e-3), \
        float(jnp.max(jnp.abs(out - ref)))

    print("KERNEL_OK")
</pallas_src>

<mosaic_0001>
module attributes {stable_mosaic.version = 11 : i64} {
  func.func @_stage1_kernel(%arg0: i32, %arg1: memref<256x16xf32, #tpu.memory_space<vmem>>, %arg2: memref<16x4xf32, #tpu.memory_space<vmem>>, %arg3: memref<1x4xf32, #tpu.memory_space<vmem>>, %arg4: memref<256x4xf32, #tpu.memory_space<vmem>>) attributes {dimension_semantics = [#tpu.dimension_semantics<parallel>], iteration_bounds = array<i64: 2>, scalar_prefetch = 0 : i64, scratch_operands = 0 : i64, tpu.core_type = #tpu.core_type<tc>, window_params = [{transform_indices = @transform_0, window_bounds = array<i64: 256, 16>}, {pipeline_mode = #tpu.pipeline_mode<synchronous>, transform_indices = @transform_1, window_bounds = array<i64: 16, 4>}, {pipeline_mode = #tpu.pipeline_mode<synchronous>, transform_indices = @transform_2, window_bounds = array<i64: 1, 4>}, {transform_indices = @transform_3, window_bounds = array<i64: 256, 4>}]} {
    %c0 = arith.constant 0 : index
    %c0_0 = arith.constant 0 : index
    %0 = vector.load %arg1[%c0, %c0_0] : memref<256x16xf32, #tpu.memory_space<vmem>>, vector<256x16xf32>
    %c0_1 = arith.constant 0 : index
    %c0_2 = arith.constant 0 : index
    %1 = vector.load %arg2[%c0_1, %c0_2] : memref<16x4xf32, #tpu.memory_space<vmem>>, vector<16x4xf32>
    %cst = arith.constant dense<0.000000e+00> : vector<256x4xf32>
    %2 = tpu.matmul %0, %1, %cst {dimension_numbers = #tpu.dot_dimension_numbers<[1], [0], [0], [1], [0, 0, 1, 1], [], []>} : vector<256x16xf32>, vector<16x4xf32>, vector<256x4xf32> -> vector<256x4xf32>
    %c0_3 = arith.constant 0 : index
    %c0_4 = arith.constant 0 : index
    %3 = vector.load %arg3[%c0_3, %c0_4] : memref<1x4xf32, #tpu.memory_space<vmem>>, vector<1x4xf32>
    %4 = vector.broadcast %3 : vector<1x4xf32> to vector<256x4xf32>
    %5 = arith.addf %2, %4 : vector<256x4xf32>
    %cst_5 = arith.constant 0.000000e+00 : f32
    %6 = vector.broadcast %cst_5 : f32 to vector<256x4xf32>
    %7 = arith.maximumf %5, %6 : vector<256x4xf32>
    %c0_6 = arith.constant 0 : index
    %c0_7 = arith.constant 0 : index
    %8 = vector.load %arg4[%c0_6, %c0_7] : memref<256x4xf32, #tpu.memory_space<vmem>>, vector<256x4xf32>
    tpu.vector_store %arg4[%c0_6, %c0_7], %7 {strides = array<i32>} : memref<256x4xf32, #tpu.memory_space<vmem>>, vector<256x4xf32>,
    return
  }
  func.func @transform_0(%arg0: i32) -> (i32, i32) {
    %c0_i32 = arith.constant 0 : i32
    %c0_i32_0 = arith.constant 0 : i32
    return %arg0, %c0_i32 : i32, i32
  }
  func.func @transform_1(%arg0: i32) -> (i32, i32) {
    %c0_i32 = arith.constant 0 : i32
    %c0_i32_0 = arith.constant 0 : i32
    %c0_i32_1 = arith.constant 0 : i32
    return %c0_i32, %c0_i32_0 : i32, i32
  }
  func.func @transform_2(%arg0: i32) -> (i32, i32) {
    %c0_i32 = arith.constant 0 : i32
    %c0_i32_0 = arith.constant 0 : i32
    %c0_i32_1 = arith.constant 0 : i32
    return %c0_i32, %c0_i32_0 : i32, i32
  }
  func.func @transform_3(%arg0: i32) -> (i32, i32) {
    %c0_i32 = arith.constant 0 : i32
    %c0_i32_0 = arith.constant 0 : i32
    return %arg0, %c0_i32 : i32, i32
  }
}

module attributes {stable_mosaic.version = 11 : i64} {
  func.func @_stage23_kernel(%arg0: i32, %arg1: i32, %arg2: i32, %arg3: memref<1x1x10x10x4xf32, #tpu.memory_space<vmem>>, %arg4: memref<1x1x64x16xf32, #tpu.memory_space<vmem>>, %arg5: memref<1x36x4xf32, #tpu.memory_space<vmem>>, %arg6: memref<1x4xf32, #tpu.memory_space<vmem>>, %arg7: memref<4x16xf32, #tpu.memory_space<vmem>>, %arg8: memref<1x16xf32, #tpu.memory_space<vmem>>, %arg9: memref<1x1x64x16xf32, #tpu.memory_space<vmem>>, %arg10: memref<64x4xf32, #tpu.memory_space<vmem>>) attributes {dimension_semantics = [#tpu.dimension_semantics<parallel>, #tpu.dimension_semantics<parallel>, #tpu.dimension_semantics<arbitrary>], iteration_bounds = array<i64: 2, 4, 3>, scalar_prefetch = 0 : i64, scratch_operands = 1 : i64, tpu.core_type = #tpu.core_type<tc>, window_params = [{transform_indices = @transform_0, window_bounds = array<i64: 1, 1, 10, 10, 4>}, {transform_indices = @transform_1, window_bounds = array<i64: 1, 1, 64, 16>}, {transform_indices = @transform_2, window_bounds = array<i64: 1, 36, 4>}, {pipeline_mode = #tpu.pipeline_mode<synchronous>, transform_indices = @transform_3, window_bounds = array<i64: 1, 4>}, {pipeline_mode = #tpu.pipeline_mode<synchronous>, transform_indices = @transform_4, window_bounds = array<i64: 4, 16>}, {pipeline_mode = #tpu.pipeline_mode<synchronous>, transform_indices = @transform_5, window_bounds = array<i64: 1, 16>}, {transform_indices = @transform_6, window_bounds = array<i64: 1, 1, 64, 16>}]} {
    %c0_i32 = arith.constant 0 : i32
    %0 = arith.cmpi eq, %arg2, %c0_i32 : i32
    %1 = arith.extui %0 : i1 to i32
    %c0_i32_0 = arith.constant 0 : i32
    %2 = arith.cmpi ne, %1, %c0_i32_0 : i32
    scf.if %2 {
      %cst_37 = arith.constant 0.000000e+00 : f32
      %64 = vector.broadcast %cst_37 : f32 to vector<64x4xf32>
      %c0_38 = arith.constant 0 : index
      %c0_39 = arith.constant 0 : index
      %65 = vector.load %arg10[%c0_38, %c0_39] : memref<64x4xf32, #tpu.memory_space<vmem>>, vector<64x4xf32>
      tpu.vector_store %arg10[%c0_38, %c0_39], %64 {strides = array<i32>} : memref<64x4xf32, #tpu.memory_space<vmem>>, vector<64x4xf32>,
    } else {
    }
    %c0 = arith.constant 0 : index
    %c0_1 = arith.constant 0 : index
    %c0_2 = arith.constant 0 : index
    %c0_3 = arith.constant 0 : index
    %c0_4 = arith.constant 0 : index
    %3 = vector.load %arg3[%c0, %c0_1, %c0_2, %c0_3, %c0_4] : memref<1x1x10x10x4xf32, #tpu.memory_space<vmem>>, vector<1x1x10x10x4xf32>
    %4 = vector.shape_cast %3 : vector<1x1x10x10x4xf32> to vector<10x10x4xf32>
    %c0_5 = arith.constant 0 : index
    %c0_6 = arith.constant 0 : index
    %5 = vector.load %arg10[%c0_5, %c0_6] : memref<64x4xf32, #tpu.memory_space<vmem>>, vector<64x4xf32>
    %6 = vector.extract_strided_slice %4 {offsets = [0, 0, 0], sizes = [8, 8, 4], strides = [1, 1, 1]} : vector<10x10x4xf32> to vector<8x8x4xf32>
    %7 = vector.shape_cast %6 : vector<8x8x4xf32> to vector<64x4xf32>
    %c0_7 = arith.constant 0 : index
    %c0_8 = arith.constant 0 : index
    %c0_9 = arith.constant 0 : index
    %8 = vector.load %arg5[%c0_7, %c0_8, %c0_9] : memref<1x36x4xf32, #tpu.memory_space<vmem>>, vector<1x4x4xf32>
    %9 = vector.shape_cast %8 : vector<1x4x4xf32> to vector<4x4xf32>
    %cst = arith.constant dense<0.000000e+00> : vector<64x4xf32>
    %10 = tpu.matmul %7, %9, %cst {dimension_numbers = #tpu.dot_dimension_numbers<[1], [0], [0], [1], [0, 0, 1, 1], [], []>} : vector<64x4xf32>, vector<4x4xf32>, vector<64x4xf32> -> vector<64x4xf32>
    %11 = arith.addf %5, %10 : vector<64x4xf32>
    %12 = vector.extract_strided_slice %4 {offsets = [0, 1, 0], sizes = [8, 8, 4], strides = [1, 1, 1]} : vector<10x10x4xf32> to vector<8x8x4xf32>
    %13 = vector.shape_cast %12 : vector<8x8x4xf32> to vector<64x4xf32>
    %c0_10 = arith.constant 0 : index
    %c4 = arith.constant 4 : index
    %c0_11 = arith.constant 0 : index
    %14 = vector.load %arg5[%c0_10, %c4, %c0_11] : memref<1x36x4xf32, #tpu.memory_space<vmem>>, vector<1x4x4xf32>
    %15 = vector.shape_cast %14 : vector<1x4x4xf32> to vector<4x4xf32>
    %cst_12 = arith.constant dense<0.000000e+00> : vector<64x4xf32>
    %16 = tpu.matmul %13, %15, %cst_12 {dimension_numbers = #tpu.dot_dimension_numbers<[1], [0], [0], [1], [0, 0, 1, 1], [], []>} : vector<64x4xf32>, vector<4x4xf32>, vector<64x4xf32> -> vector<64x4xf32>
    %17 = arith.addf %11, %16 : vector<64x4xf32>
    %18 = vector.extract_strided_slice %4 {offsets = [0, 2, 0], sizes = [8, 8, 4], strides = [1, 1, 1]} : vector<10x10x4xf32> to vector<8x8x4xf32>
    %19 = vector.shape_cast %18 : vector<8x8x4xf32> to vector<64x4xf32>
    %c0_13 = arith.constant 0 : index
    %c8 = arith.constant 8 : index
    %c0_14 = arith.constant 0 : index
    %20 = vector.load %arg5[%c0_13, %c8, %c0_14] : memref<1x36x4xf32, #tpu.memory_space<vmem>>, vector<1x4x4xf32>
    %21 = vector.shape_cast %20 : vector<1x4x4xf32> to vector<4x4xf32>
    %cst_15 = arith.constant dense<0.000000e+00> : vector<64x4xf32>
    %22 = tpu.matmul %19, %21, %cst_15 {dimension_numbers = #tpu.dot_dimension_numbers<[1], [0], [0], [1], [0, 0, 1, 1], [], []>} : vector<64x4xf32>, vector<4x4xf32>, vector<64x4xf32> -> vector<64x4xf32>
    %23 = arith.addf %17, %22 : vector<64x4xf32>
    %24 = vector.extract_strided_slice %4 {offsets = [1, 0, 0], sizes = [8, 8, 4], strides = [1, 1, 1]} : vector<10x10x4xf32> to vector<8x8x4xf32>
    %25 = vector.shape_cast %24 : vector<8x8x4xf32> to vector<64x4xf32>
    %c0_16 = arith.constant 0 : index
    %c12 = arith.constant 12 : index
    %c0_17 = arith.constant 0 : index
    %26 = vector.load %arg5[%c0_16, %c12, %c0_17] : memref<1x36x4xf32, #tpu.memory_space<vmem>>, vector<1x4x4xf32>
    %27 = vector.shape_cast %26 : vector<1x4x4xf32> to vector<4x4xf32>
    %cst_18 = arith.constant dense<0.000000e+00> : vector<64x4xf32>
    %28 = tpu.matmul %25, %27, %cst_18 {dimension_numbers = #tpu.dot_dimension_numbers<[1], [0], [0], [1], [0, 0, 1, 1], [], []>} : vector<64x4xf32>, vector<4x4xf32>, vector<64x4xf32> -> vector<64x4xf32>
    %29 = arith.addf %23, %28 : vector<64x4xf32>
    %30 = vector.extract_strided_slice %4 {offsets = [1, 1, 0], sizes = [8, 8, 4], strides = [1, 1, 1]} : vector<10x10x4xf32> to vector<8x8x4xf32>
    %31 = vector.shape_cast %30 : vector<8x8x4xf32> to vector<64x4xf32>
    %c0_19 = arith.constant 0 : index
    %c16 = arith.constant 16 : index
    %c0_20 = arith.constant 0 : index
    %32 = vector.load %arg5[%c0_19, %c16, %c0_20] : memref<1x36x4xf32, #tpu.memory_space<vmem>>, vector<1x4x4xf32>
    %33 = vector.shape_cast %32 : vector<1x4x4xf32> to vector<4x4xf32>
    %cst_21 = arith.constant dense<0.000000e+00> : vector<64x4xf32>
    %34 = tpu.matmul %31, %33, %cst_21 {dimension_numbers = #tpu.dot_dimension_numbers<[1], [0], [0], [1], [0, 0, 1, 1], [], []>} : vector<64x4xf32>, vector<4x4xf32>, vector<64x4xf32> -> vector<64x4xf32>
    %35 = arith.addf %29, %34 : vector<64x4xf32>
    %36 = vector.extract_strided_slice %4 {offsets = [1, 2, 0], sizes = [8, 8, 4], strides = [1, 1, 1]} : vector<10x10x4xf32> to vector<8x8x4xf32>
    %37 = vector.shape_cast %36 : vector<8x8x4xf32> to vector<64x4xf32>
    %c0_22 = arith.constant 0 : index
    %c20 = arith.constant 20 : index
    %c0_23 = arith.constant 0 : index
    %38 = vector.load %arg5[%c0_22, %c20, %c0_23] : memref<1x36x4xf32, #tpu.memory_space<vmem>>, vector<1x4x4xf32>
    %39 = vector.shape_cast %38 : vector<1x4x4xf32> to vector<4x4xf32>
    %cst_24 = arith.constant dense<0.000000e+00> : vector<64x4xf32>
    %40 = tpu.matmul %37, %39, %cst_24 {dimension_numbers = #tpu.dot_dimension_numbers<[1], [0], [0], [1], [0, 0, 1, 1], [], []>} : vector<64x4xf32>, vector<4x4xf32>, vector<64x4xf32> -> vector<64x4xf32>
    %41 = arith.addf %35, %40 : vector<64x4xf32>
    %42 = vector.extract_strided_slice %4 {offsets = [2, 0, 0], sizes = [8, 8, 4], strides = [1, 1, 1]} : vector<10x10x4xf32> to vector<8x8x4xf32>
    %43 = vector.shape_cast %42 : vector<8x8x4xf32> to vector<64x4xf32>
    %c0_25 = arith.constant 0 : index
    %c24 = arith.constant 24 : index
    %c0_26 = arith.constant 0 : index
    %44 = vector.load %arg5[%c0_25, %c24, %c0_26] : memref<1x36x4xf32, #tpu.memory_space<vmem>>, vector<1x4x4xf32>
    %45 = vector.shape_cast %44 : vector<1x4x4xf32> to vector<4x4xf32>
    %cst_27 = arith.constant dense<0.000000e+00> : vector<64x4xf32>
    %46 = tpu.matmul %43, %45, %cst_27 {dimension_numbers = #tpu.dot_dimension_numbers<[1], [0], [0], [1], [0, 0, 1, 1], [], []>} : vector<64x4xf32>, vector<4x4xf32>, vector<64x4xf32> -> vector<64x4xf32>
    %47 = arith.addf %41, %46 : vector<64x4xf32>
    %48 = vector.extract_strided_slice %4 {offsets = [2, 1, 0], sizes = [8, 8, 4], strides = [1, 1, 1]} : vector<10x10x4xf32> to vector<8x8x4xf32>
    %49 = vector.shape_cast %48 : vector<8x8x4xf32> to vector<64x4xf32>
    %c0_28 = arith.constant 0 : index
    %c28 = arith.constant 28 : index
    %c0_29 = arith.constant 0 : index
    %50 = vector.load %arg5[%c0_28, %c28, %c0_29] : memref<1x36x4xf32, #tpu.memory_space<vmem>>, vector<1x4x4xf32>
    %51 = vector.shape_cast %50 : vector<1x4x4xf32> to vector<4x4xf32>
    %cst_30 = arith.constant dense<0.000000e+00> : vector<64x4xf32>
    %52 = tpu.matmul %49, %51, %cst_30 {dimension_numbers = #tpu.dot_dimension_numbers<[1], [0], [0], [1], [0, 0, 1, 1], [], []>} : vector<64x4xf32>, vector<4x4xf32>, vector<64x4xf32> -> vector<64x4xf32>
    %53 = arith.addf %47, %52 : vector<64x4xf32>
    %54 = vector.extract_strided_slice %4 {offsets = [2, 2, 0], sizes = [8, 8, 4], strides = [1, 1, 1]} : vector<10x10x4xf32> to vector<8x8x4xf32>
    %55 = vector.shape_cast %54 : vector<8x8x4xf32> to vector<64x4xf32>
    %c0_31 = arith.constant 0 : index
    %c32 = arith.constant 32 : index
    %c0_32 = arith.constant 0 : index
    %56 = vector.load %arg5[%c0_31, %c32, %c0_32] : memref<1x36x4xf32, #tpu.memory_space<vmem>>, vector<1x4x4xf32>
    %57 = vector.shape_cast %56 : vector<1x4x4xf32> to vector<4x4xf32>
    %cst_33 = arith.constant dense<0.000000e+00> : vector<64x4xf32>
    %58 = tpu.matmul %55, %57, %cst_33 {dimension_numbers = #tpu.dot_dimension_numbers<[1], [0], [0], [1], [0, 0, 1, 1], [], []>} : vector<64x4xf32>, vector<4x4xf32>, vector<64x4xf32> -> vector<64x4xf32>
    %59 = arith.addf %53, %58 : vector<64x4xf32>
    %c0_34 = arith.constant 0 : index
    %c0_35 = arith.constant 0 : index
    %60 = vector.load %arg10[%c0_34, %c0_35] : memref<64x4xf32, #tpu.memory_space<vmem>>, vector<64x4xf32>
    tpu.vector_store %arg10[%c0_34, %c0_35], %59 {strides = array<i32>} : memref<64x4xf32, #tpu.memory_space<vmem>>, vector<64x4xf32>,
    %c2_i32 = arith.constant 2 : i32
    %61 = arith.cmpi eq, %arg2, %c2_i32 : i32
    %62 = arith.extui %61 : i1 to i32
    %c0_i32_36 = arith.constant 0 : i32
    %63 = arith.cmpi ne, %62, %c0_i32_36 : i32
    scf.if %63 {
      %c0_37 = arith.constant 0 : index
      %c0_38 = arith.constant 0 : index
      %64 = vector.load %arg10[%c0_37, %c0_38] : memref<64x4xf32, #tpu.memory_space<vmem>>, vector<64x4xf32>
      %c0_39 = arith.constant 0 : index
      %c0_40 = arith.constant 0 : index
      %65 = vector.load %arg6[%c0_39, %c0_40] : memref<1x4xf32, #tpu.memory_space<vmem>>, vector<1x4xf32>
      %66 = vector.broadcast %65 : vector<1x4xf32> to vector<64x4xf32>
      %67 = arith.addf %64, %66 : vector<64x4xf32>
      %cst_41 = arith.constant 0.000000e+00 : f32
      %68 = vector.broadcast %cst_41 : f32 to vector<64x4xf32>
      %69 = arith.maximumf %67, %68 : vector<64x4xf32>
      %c0_42 = arith.constant 0 : index
      %c0_43 = arith.constant 0 : index
      %70 = vector.load %arg7[%c0_42, %c0_43] : memref<4x16xf32, #tpu.memory_space<vmem>>, vector<4x16xf32>
      %cst_44 = arith.constant dense<0.000000e+00> : vector<64x16xf32>
      %71 = tpu.matmul %69, %70, %cst_44 {dimension_numbers = #tpu.dot_dimension_numbers<[1], [0], [0], [1], [0, 0, 1, 1], [], []>} : vector<64x4xf32>, vector<4x16xf32>, vector<64x16xf32> -> vector<64x16xf32>
      %c0_45 = arith.constant 0 : index
      %c0_46 = arith.constant 0 : index
      %72 = vector.load %arg8[%c0_45, %c0_46] : memref<1x16xf32, #tpu.memory_space<vmem>>, vector<1x16xf32>
      %73 = vector.broadcast %72 : vector<1x16xf32> to vector<64x16xf32>
      %74 = arith.addf %71, %73 : vector<64x16xf32>
      %c0_47 = arith.constant 0 : index
      %c0_48 = arith.constant 0 : index
      %c0_49 = arith.constant 0 : index
      %c0_50 = arith.constant 0 : index
      %75 = vector.load %arg4[%c0_47, %c0_48, %c0_49, %c0_50] : memref<1x1x64x16xf32, #tpu.memory_space<vmem>>, vector<1x1x64x16xf32>
      %76 = vector.shape_cast %75 : vector<1x1x64x16xf32> to vector<64x16xf32>
      %77 = arith.addf %74, %76 : vector<64x16xf32>
      %cst_51 = arith.constant 0.000000e+00 : f32
      %78 = vector.broadcast %cst_51 : f32 to vector<64x16xf32>
      %79 = arith.maximumf %77, %78 : vector<64x16xf32>
      %c0_52 = arith.constant 0 : index
      %c0_53 = arith.constant 0 : index
      %c0_54 = arith.constant 0 : index
      %c0_55 = arith.constant 0 : index
      %80 = vector.load %arg9[%c0_52, %c0_53, %c0_54, %c0_55] : memref<1x1x64x16xf32, #tpu.memory_space<vmem>>, vector<1x1x64x16xf32>
      %81 = vector.shape_cast %80 : vector<1x1x64x16xf32> to vector<64x16xf32>
      %82 = vector.shape_cast %79 : vector<64x16xf32> to vector<1x1x64x16xf32>
      tpu.vector_store %arg9[%c0_52, %c0_53, %c0_54, %c0_55], %82 {strides = array<i32>} : memref<1x1x64x16xf32, #tpu.memory_space<vmem>>, vector<1x1x64x16xf32>,
    } else {
    }
    return
  }
  func.func @transform_0(%arg0: i32, %arg1: i32, %arg2: i32) -> (i32, i32, i32, i32, i32) {
    %0 = arith.addi %arg1, %arg2 : i32
    %c0_i32 = arith.constant 0 : i32
    %c0_i32_0 = arith.constant 0 : i32
    %c0_i32_1 = arith.constant 0 : i32
    %c0_i32_2 = arith.constant 0 : i32
    return %arg0, %0, %c0_i32, %c0_i32_0, %c0_i32_1 : i32, i32, i32, i32, i32
  }
  func.func @transform_1(%arg0: i32, %arg1: i32, %arg2: i32) -> (i32, i32, i32, i32) {
    %c0_i32 = arith.constant 0 : i32
    %c0_i32_0 = arith.constant 0 : i32
    %c0_i32_1 = arith.constant 0 : i32
    return %arg0, %arg1, %c0_i32, %c0_i32_0 : i32, i32, i32, i32
  }
  func.func @transform_2(%arg0: i32, %arg1: i32, %arg2: i32) -> (i32, i32, i32) {
    %c0_i32 = arith.constant 0 : i32
    %c0_i32_0 = arith.constant 0 : i32
    %c0_i32_1 = arith.constant 0 : i32
    return %arg2, %c0_i32, %c0_i32_0 : i32, i32, i32
  }
  func.func @transform_3(%arg0: i32, %arg1: i32, %arg2: i32) -> (i32, i32) {
    %c0_i32 = arith.constant 0 : i32
    %c0_i32_0 = arith.constant 0 : i32
    %c0_i32_1 = arith.constant 0 : i32
    return %c0_i32, %c0_i32_0 : i32, i32
  }
  func.func @transform_4(%arg0: i32, %arg1: i32, %arg2: i32) -> (i32, i32) {
    %c0_i32 = arith.constant 0 : i32
    %c0_i32_0 = arith.constant 0 : i32
    %c0_i32_1 = arith.constant 0 : i32
    return %c0_i32, %c0_i32_0 : i32, i32
  }
  func.func @transform_5(%arg0: i32, %arg1: i32, %arg2: i32) -> (i32, i32) {
    %c0_i32 = arith.constant 0 : i32
    %c0_i32_0 = arith.constant 0 : i32
    %c0_i32_1 = arith.constant 0 : i32
    return %c0_i32, %c0_i32_0 : i32, i32
  }
  func.func @transform_6(%arg0: i32, %arg1: i32, %arg2: i32) -> (i32, i32, i32, i32) {
    %c0_i32 = arith.constant 0 : i32
    %c0_i32_0 = arith.constant 0 : i32
    %c0_i32_1 = arith.constant 0 : i32
    return %arg0, %arg1, %c0_i32, %c0_i32_0 : i32, i32, i32, i32
  }
}

</mosaic_0001>

<llo_original>
// kernel: bottleneck_forward.2
$region0: #{bottleneck_forward.2}
  #allocation0 [shape = 'u32[]', space=smem, size = 0x4, offset = 0x4, fixed_abs, tag = 'smem constant byte address 0x4 - core index']
  #allocation1 [shape = 'u32[144,128]{1,0:T(1,128)}', space=vmem, size = 0x12000, scoped, tag = 'internal scratch']
  %s0 = inlined_call_operand.hbm [shape: f32[512,16], index: 0, kind: input, shape index: {}]
  %s1 = inlined_call_operand.vmem [shape: f32[16,4], index: 1, kind: input, shape index: {}]
  %s2 = inlined_call_operand.vmem [shape: f32[1,4], index: 2, kind: input, shape index: {}]
  %s3 = inlined_call_operand.vmem [shape: f32[512,4], index: 3, kind: output, shape index: {}]
  %s4 = sld [smem:[#allocation0]]
  $region49: #{bottleneck_forward.2} parent=0
    _
  %s6 = ssub.s32 1, %s4
  %s7 = scalar_select 0, %s6, %s4
  $region1: #{bottleneck_forward.2} parent=0
    #allocation2 [shape = 'u8[262144]{0}', space=vmem, size = 0x40000, scoped, tag = 'input window, operand 0']
    #allocation3 [shape = 's32[2]{0}', space=sflag, size = 0x8, scoped, tag = 'scoped memory for bottleneck_forward.2']
    %8 = vsyncpa [#allocation3], 0
    %s9 = scalar_lea.sflag [#allocation3], 1
    %10 = vsyncpa %s9, 0
    loop: start=0, step=1, limit=4
    $region2: #{bottleneck_forward.2} parent=1 // loop_pre_header
      _
    $region3: #{bottleneck_forward.2} parent=1 // loop_header
      %s12 = sphi 0, %s16
      %p13 = scmp.ge.s32.totalorder %s12, 4
      %s22 = sphi 0, %s24
      %s25 = sphi 0, %s22
      %s26 = sphi 0, %s25
      %s42 = sphi 0, %s26
      %s46 = sphi 0, %s46
      %s48 = sphi 0, %s46
      %s49 = sphi 0, %s48
      %s63 = sphi 0, %s49
      %s67 = sphi 0, %s67
      %s69 = sphi 0, %s67
      %s70 = sphi 0, %s69
      %s84 = sphi 0, %s70
      %s90 = sphi 0, %s92
      %s93 = sphi 0, %s90
      %s94 = sphi 0, %s93
      %s110 = sphi 0, %s94
    $region4: #{bottleneck_forward.2} parent=1 // loop_header_branch
      %15 = sbr.rel (%p13) target = $region8
    $region5: #{bottleneck_forward.2} parent=1 // loop_body
      %s17 = ssub.s32 %s12, 1
      %s18 = ssub.s32 %s12, 2
      %s19 = sadd.s32 %s12, 1
      %s20 = ssub.s32 %s12, %s19
      %p21 = scmp.eq.s32.totalorder %s20, 0
      %s23 = sadd.s32 %s22, 1
      %s24 = scalar_select %p21, %s22, %s23
      %p27 = pneg %p21
      %p28 = scmp.eq.s32.totalorder %s12, 1
      %p29 = por %p27, %p28
      %p30 = scmp.ne.s32.totalorder %s22, %s25
      %p31 = scmp.eq.s32.totalorder %s12, 0
      %p32 = por %p30, %p31
      %p33 = scmp.ne.s32.totalorder %s22, %s25
      %p34 = scmp.eq.s32.totalorder %s17, 1
      %p35 = por %p33, %p34
      %p36 = scmp.ne.s32.totalorder %s25, %s26
      %p37 = scmp.eq.s32.totalorder %s17, 0
      %p38 = por %p36, %p37
      %p39 = scmp.ne.s32.totalorder %s25, %s26
      %p40 = scmp.eq.s32.totalorder %s18, 1
      %p41 = por %p39, %p40
      %p43 = scmp.ne.s32.totalorder %s26, %s42
      %p44 = scmp.eq.s32.totalorder %s18, 0
      %p45 = por %p43, %p44
      %s47 = sadd.s32 %s46, 1
      %p50 = scmp.eq.s32.totalorder %s12, 1
      %p51 = scmp.ne.s32.totalorder %s46, %s48
      %p52 = scmp.eq.s32.totalorder %s12, 0
      %p53 = por %p51, %p52
      %p54 = scmp.ne.s32.totalorder %s46, %s48
      %p55 = scmp.eq.s32.totalorder %s17, 1
      %p56 = por %p54, %p55
      %p57 = scmp.ne.s32.totalorder %s48, %s49
      %p58 = scmp.eq.s32.totalorder %s17, 0
      %p59 = por %p57, %p58
      %p60 = scmp.ne.s32.totalorder %s48, %s49
      %p61 = scmp.eq.s32.totalorder %s18, 1
      %p62 = por %p60, %p61
      %p64 = scmp.ne.s32.totalorder %s49, %s63
      %p65 = scmp.eq.s32.totalorder %s18, 0
      %p66 = por %p64, %p65
      %s68 = sadd.s32 %s67, 1
      %p71 = scmp.eq.s32.totalorder %s12, 1
      %p72 = scmp.ne.s32.totalorder %s67, %s69
      %p73 = scmp.eq.s32.totalorder %s12, 0
      %p74 = por %p72, %p73
      %p75 = scmp.ne.s32.totalorder %s67, %s69
      %p76 = scmp.eq.s32.totalorder %s17, 1
      %p77 = por %p75, %p76
      %p78 = scmp.ne.s32.totalorder %s69, %s70
      %p79 = scmp.eq.s32.totalorder %s17, 0
      %p80 = por %p78, %p79
      %p81 = scmp.ne.s32.totalorder %s69, %s70
      %p82 = scmp.eq.s32.totalorder %s18, 1
      %p83 = por %p81, %p82
      %p85 = scmp.ne.s32.totalorder %s70, %s84
      %p86 = scmp.eq.s32.totalorder %s18, 0
      %p87 = por %p85, %p86
      %s88 = ssub.s32 %s12, %s19
      %p89 = scmp.eq.s32.totalorder %s88, 0
      %s91 = sadd.s32 %s90, 1
      %s92 = scalar_select %p89, %s90, %s91
      %p95 = pneg %p89
      %p96 = scmp.eq.s32.totalorder %s12, 1
      %p97 = por %p95, %p96
      %p98 = scmp.ne.s32.totalorder %s90, %s93
      %p99 = scmp.eq.s32.totalorder %s12, 0
      %p100 = por %p98, %p99
      %p101 = scmp.ne.s32.totalorder %s90, %s93
      %p102 = scmp.eq.s32.totalorder %s17, 1
      %p103 = por %p101, %p102
      %p104 = scmp.ne.s32.totalorder %s93, %s94
      %p105 = scmp.eq.s32.totalorder %s17, 0
      %p106 = por %p104, %p105
      %p107 = scmp.ne.s32.totalorder %s93, %s94
      %p108 = scmp.eq.s32.totalorder %s18, 1
      %p109 = por %p107, %p108
      %p111 = scmp.ne.s32.totalorder %s94, %s110
      %p112 = scmp.eq.s32.totalorder %s18, 0
      %p113 = por %p111, %p112
      %p114 = scmp.le.s32.totalorder 1, %s12
      %p115 = scmp.lt.s32.totalorder %s12, 3
      %p116 = pnand %p114, %p115
      %p117 = pneg %p116
      // Predicated region
      $region9: #{bottleneck_forward.2} parent=5 // pred_check
        _
      $region10: #{bottleneck_forward.2} parent=5 // pred_check_branch
        %119 = sbr.rel (%p116) target = $region12
      $region11: #{bottleneck_forward.2} parent=5 // pred_region
        %s120 = ssub.s32 %s12, 1
        // Predicated region
        $region13: #{bottleneck_forward.2} parent=11 // pred_check
          %p121 = pneg %p59
        $region14: #{bottleneck_forward.2} parent=11 // pred_check_branch
          %123 = sbr.rel (%p121) target = $region16
        $region15: #{bottleneck_forward.2} parent=11 // pred_region
          _
        $region16: #{bottleneck_forward.2} parent=11 // pred_fallthru
          _
        // Predicated region
        $region17: #{bottleneck_forward.2} parent=11 // pred_check
          %p124 = pneg %p80
        $region18: #{bottleneck_forward.2} parent=11 // pred_check_branch
          %126 = sbr.rel (%p124) target = $region20
        $region19: #{bottleneck_forward.2} parent=11 // pred_region
          _
        $region20: #{bottleneck_forward.2} parent=11 // pred_fallthru
          _
      $region12: #{bottleneck_forward.2} parent=5 // pred_fallthru
        _
      %p127 = scmp.lt.s32.totalorder %s12, 2
      // Predicated region
      $region21: #{bottleneck_forward.2} parent=5 // pred_check
        %p128 = pneg %p127
      $region22: #{bottleneck_forward.2} parent=5 // pred_check_branch
        %130 = sbr.rel (%p128) target = $region24
      $region23: #{bottleneck_forward.2} parent=5 // pred_region
        // Predicated region
        $region25: #{bottleneck_forward.2} parent=23 // pred_check
          %p131 = pneg %p32
        $region26: #{bottleneck_forward.2} parent=23 // pred_check_branch
          %133 = sbr.rel (%p131) target = $region28
        $region27: #{bottleneck_forward.2} parent=23 // pred_region
          %s134 = sand.u32 %s22, 1
          %s135 = scalar_lea.sflag [#allocation3], %s134
          %s136 = sand.u32 %s22, 1
          %s137 = smul.addr %s136, 256
          %s138 = scalar_lea.vmem [#allocation2], %s137
          %s139 = smul.u32 32, %s12
          %s141 = ssub.s32 4096, 4096
          %142 = vsyncadd %s135, %s141
          %s143 = smul.addr %s139, 128
          %s144 = scalar_lea.hbm %s0, %s143
          %s145 = sshll.u32 %s138, 4
          %s146 = int_to_ptr.vmem [resolvable:$true] %s145
          %151 = dma.hbm_to_vmem [thread:$0]  %s144, 4096, %s146, %s135, 128, 128, 8
        $region28: #{bottleneck_forward.2} parent=23 // pred_fallthru
          _
      $region24: #{bottleneck_forward.2} parent=5 // pred_fallthru
        _
      %p152 = scmp.le.s32.totalorder 1, %s12
      %p153 = scmp.lt.s32.totalorder %s12, 3
      %p154 = pnand %p152, %p153
      %p155 = pneg %p154
      // Predicated region
      $region29: #{bottleneck_forward.2} parent=5 // pred_check
        _
      $region30: #{bottleneck_forward.2} parent=5 // pred_check_branch
        %157 = sbr.rel (%p154) target = $region32
      $region31: #{bottleneck_forward.2} parent=5 // pred_region
        %s158 = ssub.s32 %s12, 1
        %s159 = sand.u32 %s25, 1
        %s160 = scalar_lea.sflag [#allocation3], %s159
        %s161 = sand.u32 %s25, 1
        %s162 = smul.addr %s161, 256
        %s163 = scalar_lea.vmem [#allocation2], %s162
        // Predicated region
        $region33: #{bottleneck_forward.2} parent=31 // pred_check
          %p164 = pneg %p38
        $region34: #{bottleneck_forward.2} parent=31 // pred_check_branch
          %166 = sbr.rel (%p164) target = $region36
        $region35: #{bottleneck_forward.2} parent=31 // pred_region
          %167 = dma.done %s160, 4096
        $region36: #{bottleneck_forward.2} parent=31 // pred_fallthru
          _
        %s168 = sand.u32 %s25, 1
        %s169 = scalar_lea.sflag [#allocation3], %s168
        %s170 = sand.u32 %s25, 1
        %s171 = smul.addr %s170, 256
        %s172 = scalar_lea.vmem [#allocation2], %s171
        %p173 = pneg %p38
        %p174 = pneg %p35
        %p175 = pneg %p59
        %p176 = pneg %p56
        %p177 = pneg %p80
        %p178 = pneg %p77
        %p179 = pneg %p106
        %p180 = pneg %p103
        %s181 = smul.u32 32, %s17
        %p182 = scmp.lt.s32.totalorder %s181, 63
        %s183 = scalar_select %p182, %s181, 63
        %s184 = smul.addr %s183, 8
        %s185 = scalar_lea.vmem %s3, %s184
        %s186 = smul.u32 32, %s17
        %s187 = smul.u32 32, %s17
        %p188 = scmp.lt.s32.totalorder %s187, 63
        %s189 = scalar_select %p188, %s187, 63
        %s190 = smul.addr %s189, 8
        %s191 = scalar_lea.vmem %s3, %s190
        %s192 = smul.u32 32, %s17
        %v193 = vld [vmem:[%s163] sm:$0xff]
        %v194 = vld [vmem:[%s163 + $0x8] sm:$0xff]
        %v195 = vld [vmem:[%s163 + $0x10] sm:$0xff]
        %v196 = vld [vmem:[%s163 + $0x18] sm:$0xff]
        %v197 = vld [vmem:[%s163 + $0x20] sm:$0xff]
        %v198 = vld [vmem:[%s163 + $0x28] sm:$0xff]
        %v199 = vld [vmem:[%s163 + $0x30] sm:$0xff]
        %v200 = vld [vmem:[%s163 + $0x38] sm:$0xff]
        %v201 = vld [vmem:[%s163 + $0x40] sm:$0xff]
        %v202 = vld [vmem:[%s163 + $0x48] sm:$0xff]
        %v203 = vld [vmem:[%s163 + $0x50] sm:$0xff]
        %v204 = vld [vmem:[%s163 + $0x58] sm:$0xff]
        %v205 = vld [vmem:[%s163 + $0x60] sm:$0xff]
        %v206 = vld [vmem:[%s163 + $0x68] sm:$0xff]
        %v207 = vld [vmem:[%s163 + $0x70] sm:$0xff]
        %v208 = vld [vmem:[%s163 + $0x78] sm:$0xff]
        %v209 = vld [vmem:[%s163 + $0x80] sm:$0xff]
        %v210 = vld [vmem:[%s163 + $0x88] sm:$0xff]
        %v211 = vld [vmem:[%s163 + $0x90] sm:$0xff]
        %v212 = vld [vmem:[%s163 + $0x98] sm:$0xff]
        %v213 = vld [vmem:[%s163 + $0xa0] sm:$0xff]
        %v214 = vld [vmem:[%s163 + $0xa8] sm:$0xff]
        %v215 = vld [vmem:[%s163 + $0xb0] sm:$0xff]
        %v216 = vld [vmem:[%s163 + $0xb8] sm:$0xff]
        %v217 = vld [vmem:[%s163 + $0xc0] sm:$0xff]
        %v218 = vld [vmem:[%s163 + $0xc8] sm:$0xff]
        %v219 = vld [vmem:[%s163 + $0xd0] sm:$0xff]
        %v220 = vld [vmem:[%s163 + $0xd8] sm:$0xff]
        %v221 = vld [vmem:[%s163 + $0xe0] sm:$0xff]
        %v222 = vld [vmem:[%s163 + $0xe8] sm:$0xff]
        %v223 = vld [vmem:[%s163 + $0xf0] sm:$0xff]
        %v224 = vld [vmem:[%s163 + $0xf8] sm:$0xff]
        %v225 = vld [vmem:[%s1] sm:$0xff]
        %v226 = vld [vmem:[%s1 + $0x8] sm:$0xff]
        %v227 = vld [vmem:[%s2] sm:$0x1]
        %v229 = vlaneseq
        %v230 = vshrl.u32 %v229, 7
        %v231 = vsub.s32 0, %v230
        %v232 = vrot.slane %v227, %v231
        %vm234 = vcmask 130048
        %v236 = vsel %vm234, %v193, 0
        %v239 = vsel %vm234, %v194, 0
        %v242 = vsel %vm234, %v195, 0
        %v245 = vsel %vm234, %v196, 0
        %v248 = vsel %vm234, %v197, 0
        %v251 = vsel %vm234, %v198, 0
        %v254 = vsel %vm234, %v199, 0
        %v257 = vsel %vm234, %v200, 0
        %v260 = vsel %vm234, %v201, 0
        %v263 = vsel %vm234, %v202, 0
        %v266 = vsel %vm234, %v203, 0
        %v269 = vsel %vm234, %v204, 0
        %v272 = vsel %vm234, %v205, 0
        %v275 = vsel %vm234, %v206, 0
        %v278 = vsel %vm234, %v207, 0
        %v281 = vsel %vm234, %v208, 0
        %v284 = vsel %vm234, %v209, 0
        %v287 = vsel %vm234, %v210, 0
        %v290 = vsel %vm234, %v211, 0
        %v293 = vsel %vm234, %v212, 0
        %v296 = vsel %vm234, %v213, 0
        %v299 = vsel %vm234, %v214, 0
        %v302 = vsel %vm234, %v215, 0
        %v305 = vsel %vm234, %v216, 0
        %v308 = vsel %vm234, %v217, 0
        %v311 = vsel %vm234, %v218, 0
        %v314 = vsel %vm234, %v219, 0
        %v317 = vsel %vm234, %v220, 0
        %v320 = vsel %vm234, %v221, 0
        %v323 = vsel %vm234, %v222, 0
        %v326 = vsel %vm234, %v223, 0
        %v329 = vsel %vm234, %v224, 0
        %331 = vmatprep.subr.mxu0 0.0
        %332 = vmatpush1.msra.mxu0 0.0
        %333 = vmatprep.subr.mxu0 0.0
        %334 = vmatpush1.msra.mxu0 0.0
        %335 = vmatprep.subr.mxu0 0.0
        %336 = vmatpush1.msra.mxu0 0.0
        %337 = vmatprep.subr.mxu0 0.0
        %338 = vmatpush1.msra.mxu0 0.0
        %339 = vmatprep.subr.mxu0 0.0
        %340 = vmatpush1.msra.mxu0 0.0
        %341 = vmatprep.subr.mxu0 0.0
        %342 = vmatpush1.msra.mxu0 0.0
        %343 = vmatprep.subr.mxu0 0.0
        %344 = vmatpush1.msra.mxu0 0.0
        %345 = vmatprep.subr.mxu0 0.0
        %346 = vmatpush1.msra.mxu0 0.0
        %347 = vmatprep.subr.mxu0 0.0
        %348 = vmatpush1.msra.mxu0 0.0
        %349 = vmatprep.subr.mxu0 0.0
        %350 = vmatpush1.msra.mxu0 0.0
        %351 = vmatprep.subr.mxu0 0.0
        %352 = vmatpush1.msra.mxu0 0.0
        %353 = vmatprep.subr.mxu0 0.0
        %354 = vmatpush1.msra.mxu0 0.0
        %355 = vmatprep.subr.mxu0 0.0
        %356 = vmatpush1.msra.mxu0 0.0
        %357 = vmatprep.subr.mxu0 0.0
        %358 = vmatpush1.msra.mxu0 0.0
        %359 = vmatprep.subr.mxu0 0.0
        %360 = vmatpush1.msra.mxu0 %v226
        %361 = vmatprep.subr.mxu0 0.0
        %362 = vmatpush1.msra.mxu0 %v225
        %363 = vmatprep.subr.mxu0 0.0
        %364 = vmatpush2.msra.mxu0 0.0
        %365 = vmatprep.subr.mxu0 0.0
        %366 = vmatpush2.msra.mxu0 0.0
        %367 = vmatprep.subr.mxu0 0.0
        %368 = vmatpush2.msra.mxu0 0.0
        %369 = vmatprep.subr.mxu0 0.0
        %370 = vmatpush2.msra.mxu0 0.0
        %371 = vmatprep.subr.mxu0 0.0
        %372 = vmatpush2.msra.mxu0 0.0
        %373 = vmatprep.subr.mxu0 0.0
        %374 = vmatpush2.msra.mxu0 0.0
        %375 = vmatprep.subr.mxu0 0.0
        %376 = vmatpush2.msra.mxu0 0.0
        %377 = vmatprep.subr.mxu0 0.0
        %378 = vmatpush2.msra.mxu0 0.0
        %379 = vmatprep.subr.mxu0 0.0
        %380 = vmatpush2.msra.mxu0 0.0
        %381 = vmatprep.subr.mxu0 0.0
        %382 = vmatpush2.msra.mxu0 0.0
        %383 = vmatprep.subr.mxu0 0.0
        %384 = vmatpush2.msra.mxu0 0.0
        %385 = vmatprep.subr.mxu0 0.0
        %386 = vmatpush2.msra.mxu0 0.0
        %387 = vmatprep.subr.mxu0 0.0
        %388 = vmatpush2.msra.mxu0 0.0
        %389 = vmatprep.subr.mxu0 0.0
        %390 = vmatpush2.msra.mxu0 0.0
        %391 = vmatprep.subr.mxu0 0.0
        %392 = vmatpush2.msra.mxu0 0.0
        %393 = vmatprep.subr.mxu0 0.0
        %394 = vmatpush2.msra.mxu0 0.0
        %395 = vmatprep.mubr.f32.mxu0 0.0
        %396 = vmatmul.mubr.f32.gmra.mxu0 %v236
        %v397 = vpop.f32.mrf.mxu0
        %v398 = vadd.f32 %v232, %v397
        %v399 = vpop.f32.mrf.mxu0
        %400 = vmatprep.mubr.f32.mxu0 0.0
        %401 = vmatmul.mubr.f32.gmra.mxu0 %v239
        %v402 = vpop.f32.mrf.mxu0
        %v403 = vadd.f32 %v232, %v402
        %v404 = vpop.f32.mrf.mxu0
        %405 = vmatprep.mubr.f32.mxu0 0.0
        %406 = vmatmul.mubr.f32.gmra.mxu0 %v242
        %v407 = vpop.f32.mrf.mxu0
        %v408 = vadd.f32 %v232, %v407
        %v409 = vpop.f32.mrf.mxu0
        %410 = vmatprep.mubr.f32.mxu0 0.0
        %411 = vmatmul.mubr.f32.gmra.mxu0 %v245
        %v412 = vpop.f32.mrf.mxu0
        %v413 = vadd.f32 %v232, %v412
        %v414 = vpop.f32.mrf.mxu0
        %415 = vmatprep.mubr.f32.mxu0 0.0
        %416 = vmatmul.mubr.f32.gmra.mxu0 %v248
        %v417 = vpop.f32.mrf.mxu0
        %v418 = vadd.f32 %v232, %v417
        %v419 = vpop.f32.mrf.mxu0
        %420 = vmatprep.mubr.f32.mxu0 0.0
        %421 = vmatmul.mubr.f32.gmra.mxu0 %v251
        %v422 = vpop.f32.mrf.mxu0
        %v423 = vadd.f32 %v232, %v422
        %v424 = vpop.f32.mrf.mxu0
        %425 = vmatprep.mubr.f32.mxu0 0.0
        %426 = vmatmul.mubr.f32.gmra.mxu0 %v254
        %v427 = vpop.f32.mrf.mxu0
        %v428 = vadd.f32 %v232, %v427
        %v429 = vpop.f32.mrf.mxu0
        %430 = vmatprep.mubr.f32.mxu0 0.0
        %431 = vmatmul.mubr.f32.gmra.mxu0 %v257
        %v432 = vpop.f32.mrf.mxu0
        %v433 = vadd.f32 %v232, %v432
        %v434 = vpop.f32.mrf.mxu0
        %435 = vmatprep.mubr.f32.mxu0 0.0
        %436 = vmatmul.mubr.f32.gmra.mxu0 %v260
        %v437 = vpop.f32.mrf.mxu0
        %v438 = vadd.f32 %v232, %v437
        %v439 = vpop.f32.mrf.mxu0
        %440 = vmatprep.mubr.f32.mxu0 0.0
        %441 = vmatmul.mubr.f32.gmra.mxu0 %v263
        %v442 = vpop.f32.mrf.mxu0
        %v443 = vadd.f32 %v232, %v442
        %v444 = vpop.f32.mrf.mxu0
        %445 = vmatprep.mubr.f32.mxu0 0.0
        %446 = vmatmul.mubr.f32.gmra.mxu0 %v266
        %v447 = vpop.f32.mrf.mxu0
        %v448 = vadd.f32 %v232, %v447
        %v449 = vpop.f32.mrf.mxu0
        %450 = vmatprep.mubr.f32.mxu0 0.0
        %451 = vmatmul.mubr.f32.gmra.mxu0 %v269
        %v452 = vpop.f32.mrf.mxu0
        %v453 = vadd.f32 %v232, %v452
        %v454 = vpop.f32.mrf.mxu0
        %455 = vmatprep.mubr.f32.mxu0 0.0
        %456 = vmatmul.mubr.f32.gmra.mxu0 %v272
        %v457 = vpop.f32.mrf.mxu0
        %v458 = vadd.f32 %v232, %v457
        %v459 = vpop.f32.mrf.mxu0
        %460 = vmatprep.mubr.f32.mxu0 0.0
        %461 = vmatmul.mubr.f32.gmra.mxu0 %v275
        %v462 = vpop.f32.mrf.mxu0
        %v463 = vadd.f32 %v232, %v462
        %v464 = vpop.f32.mrf.mxu0
        %465 = vmatprep.mubr.f32.mxu0 0.0
        %466 = vmatmul.mubr.f32.gmra.mxu0 %v278
        %v467 = vpop.f32.mrf.mxu0
        %v468 = vadd.f32 %v232, %v467
        %v469 = vpop.f32.mrf.mxu0
        %470 = vmatprep.mubr.f32.mxu0 0.0
        %471 = vmatmul.mubr.f32.gmra.mxu0 %v281
        %v472 = vpop.f32.mrf.mxu0
        %v473 = vadd.f32 %v232, %v472
        %v474 = vpop.f32.mrf.mxu0
        %475 = vmatprep.mubr.f32.mxu0 0.0
        %476 = vmatmul.mubr.f32.gmra.mxu0 %v284
        %v477 = vpop.f32.mrf.mxu0
        %v478 = vadd.f32 %v232, %v477
        %v479 = vpop.f32.mrf.mxu0
        %480 = vmatprep.mubr.f32.mxu0 0.0
        %481 = vmatmul.mubr.f32.gmra.mxu0 %v287
        %v482 = vpop.f32.mrf.mxu0
        %v483 = vadd.f32 %v232, %v482
        %v484 = vpop.f32.mrf.mxu0
        %485 = vmatprep.mubr.f32.mxu0 0.0
        %486 = vmatmul.mubr.f32.gmra.mxu0 %v290
        %v487 = vpop.f32.mrf.mxu0
        %v488 = vadd.f32 %v232, %v487
        %v489 = vpop.f32.mrf.mxu0
        %490 = vmatprep.mubr.f32.mxu0 0.0
        %491 = vmatmul.mubr.f32.gmra.mxu0 %v293
        %v492 = vpop.f32.mrf.mxu0
        %v493 = vadd.f32 %v232, %v492
        %v494 = vpop.f32.mrf.mxu0
        %495 = vmatprep.mubr.f32.mxu0 0.0
        %496 = vmatmul.mubr.f32.gmra.mxu0 %v296
        %v497 = vpop.f32.mrf.mxu0
        %v498 = vadd.f32 %v232, %v497
        %v499 = vpop.f32.mrf.mxu0
        %500 = vmatprep.mubr.f32.mxu0 0.0
        %501 = vmatmul.mubr.f32.gmra.mxu0 %v299
        %v502 = vpop.f32.mrf.mxu0
        %v503 = vadd.f32 %v232, %v502
        %v504 = vpop.f32.mrf.mxu0
        %505 = vmatprep.mubr.f32.mxu0 0.0
        %506 = vmatmul.mubr.f32.gmra.mxu0 %v302
        %v507 = vpop.f32.mrf.mxu0
        %v508 = vadd.f32 %v232, %v507
        %v509 = vpop.f32.mrf.mxu0
        %510 = vmatprep.mubr.f32.mxu0 0.0
        %511 = vmatmul.mubr.f32.gmra.mxu0 %v305
        %v512 = vpop.f32.mrf.mxu0
        %v513 = vadd.f32 %v232, %v512
        %v514 = vpop.f32.mrf.mxu0
        %515 = vmatprep.mubr.f32.mxu0 0.0
        %516 = vmatmul.mubr.f32.gmra.mxu0 %v308
        %v517 = vpop.f32.mrf.mxu0
        %v518 = vadd.f32 %v232, %v517
        %v519 = vpop.f32.mrf.mxu0
        %520 = vmatprep.mubr.f32.mxu0 0.0
        %521 = vmatmul.mubr.f32.gmra.mxu0 %v311
        %v522 = vpop.f32.mrf.mxu0
        %v523 = vadd.f32 %v232, %v522
        %v524 = vpop.f32.mrf.mxu0
        %525 = vmatprep.mubr.f32.mxu0 0.0
        %526 = vmatmul.mubr.f32.gmra.mxu0 %v314
        %v527 = vpop.f32.mrf.mxu0
        %v528 = vadd.f32 %v232, %v527
        %v529 = vpop.f32.mrf.mxu0
        %530 = vmatprep.mubr.f32.mxu0 0.0
        %531 = vmatmul.mubr.f32.gmra.mxu0 %v317
        %v532 = vpop.f32.mrf.mxu0
        %v533 = vadd.f32 %v232, %v532
        %v534 = vpop.f32.mrf.mxu0
        %535 = vmatprep.mubr.f32.mxu0 0.0
        %536 = vmatmul.mubr.f32.gmra.mxu0 %v320
        %v537 = vpop.f32.mrf.mxu0
        %v538 = vadd.f32 %v232, %v537
        %v539 = vpop.f32.mrf.mxu0
        %540 = vmatprep.mubr.f32.mxu0 0.0
        %541 = vmatmul.mubr.f32.gmra.mxu0 %v323
        %v542 = vpop.f32.mrf.mxu0
        %v543 = vadd.f32 %v232, %v542
        %v544 = vpop.f32.mrf.mxu0
        %545 = vmatprep.mubr.f32.mxu0 0.0
        %546 = vmatmul.mubr.f32.gmra.mxu0 %v326
        %v547 = vpop.f32.mrf.mxu0
        %v548 = vadd.f32 %v232, %v547
        %v549 = vpop.f32.mrf.mxu0
        %550 = vmatprep.mubr.f32.mxu0 0.0
        %551 = vmatmul.mubr.f32.gmra.mxu0 %v329
        %v552 = vpop.f32.mrf.mxu0
        %v553 = vadd.f32 %v232, %v552
        %v554 = vpop.f32.mrf.mxu0
        %555 = vdwg.mxu0
        %v556 = vmax.f32 %v398, 0.0
        %v557 = vmax.f32 %v403, 0.0
        %v558 = vmax.f32 %v408, 0.0
        %v559 = vmax.f32 %v413, 0.0
        %v560 = vmax.f32 %v418, 0.0
        %v561 = vmax.f32 %v423, 0.0
        %v562 = vmax.f32 %v428, 0.0
        %v563 = vmax.f32 %v433, 0.0
        %v564 = vmax.f32 %v438, 0.0
        %v565 = vmax.f32 %v443, 0.0
        %v566 = vmax.f32 %v448, 0.0
        %v567 = vmax.f32 %v453, 0.0
        %v568 = vmax.f32 %v458, 0.0
        %v569 = vmax.f32 %v463, 0.0
        %v570 = vmax.f32 %v468, 0.0
        %v571 = vmax.f32 %v473, 0.0
        %v572 = vmax.f32 %v478, 0.0
        %v573 = vmax.f32 %v483, 0.0
        %v574 = vmax.f32 %v488, 0.0
        %v575 = vmax.f32 %v493, 0.0
        %v576 = vmax.f32 %v498, 0.0
        %v577 = vmax.f32 %v503, 0.0
        %v578 = vmax.f32 %v508, 0.0
        %v579 = vmax.f32 %v513, 0.0
        %v580 = vmax.f32 %v518, 0.0
        %v581 = vmax.f32 %v523, 0.0
        %v582 = vmax.f32 %v528, 0.0
        %v583 = vmax.f32 %v533, 0.0
        %v584 = vmax.f32 %v538, 0.0
        %v585 = vmax.f32 %v543, 0.0
        %v586 = vmax.f32 %v548, 0.0
        %v587 = vmax.f32 %v553, 0.0
        %vm588 = vcmask 31744
        %589 = vst.msk [vmem:[%s191] sm:$0xff] %vm588, %v556
        %590 = vst.msk [vmem:[%s191 + $0x8] sm:$0xff] %vm588, %v557
        %591 = vst.msk [vmem:[%s191 + $0x10] sm:$0xff] %vm588, %v558
        %592 = vst.msk [vmem:[%s191 + $0x18] sm:$0xff] %vm588, %v559
        %593 = vst.msk [vmem:[%s191 + $0x20] sm:$0xff] %vm588, %v560
        %594 = vst.msk [vmem:[%s191 + $0x28] sm:$0xff] %vm588, %v561
        %595 = vst.msk [vmem:[%s191 + $0x30] sm:$0xff] %vm588, %v562
        %596 = vst.msk [vmem:[%s191 + $0x38] sm:$0xff] %vm588, %v563
        %597 = vst.msk [vmem:[%s191 + $0x40] sm:$0xff] %vm588, %v564
        %598 = vst.msk [vmem:[%s191 + $0x48] sm:$0xff] %vm588, %v565
        %599 = vst.msk [vmem:[%s191 + $0x50] sm:$0xff] %vm588, %v566
        %600 = vst.msk [vmem:[%s191 + $0x58] sm:$0xff] %vm588, %v567
        %601 = vst.msk [vmem:[%s191 + $0x60] sm:$0xff] %vm588, %v568
        %602 = vst.msk [vmem:[%s191 + $0x68] sm:$0xff] %vm588, %v569
        %603 = vst.msk [vmem:[%s191 + $0x70] sm:$0xff] %vm588, %v570
        %604 = vst.msk [vmem:[%s191 + $0x78] sm:$0xff] %vm588, %v571
        %605 = vst.msk [vmem:[%s191 + $0x80] sm:$0xff] %vm588, %v572
        %606 = vst.msk [vmem:[%s191 + $0x88] sm:$0xff] %vm588, %v573
        %607 = vst.msk [vmem:[%s191 + $0x90] sm:$0xff] %vm588, %v574
        %608 = vst.msk [vmem:[%s191 + $0x98] sm:$0xff] %vm588, %v575
        %609 = vst.msk [vmem:[%s191 + $0xa0] sm:$0xff] %vm588, %v576
        %610 = vst.msk [vmem:[%s191 + $0xa8] sm:$0xff] %vm588, %v577
        %611 = vst.msk [vmem:[%s191 + $0xb0] sm:$0xff] %vm588, %v578
        %612 = vst.msk [vmem:[%s191 + $0xb8] sm:$0xff] %vm588, %v579
        %613 = vst.msk [vmem:[%s191 + $0xc0] sm:$0xff] %vm588, %v580
        %614 = vst.msk [vmem:[%s191 + $0xc8] sm:$0xff] %vm588, %v581
        %615 = vst.msk [vmem:[%s191 + $0xd0] sm:$0xff] %vm588, %v582
        %616 = vst.msk [vmem:[%s191 + $0xd8] sm:$0xff] %vm588, %v583
        %617 = vst.msk [vmem:[%s191 + $0xe0] sm:$0xff] %vm588, %v584
        %618 = vst.msk [vmem:[%s191 + $0xe8] sm:$0xff] %vm588, %v585
        %619 = vst.msk [vmem:[%s191 + $0xf0] sm:$0xff] %vm588, %v586
        %620 = vst.msk [vmem:[%s191 + $0xf8] sm:$0xff] %vm588, %v587
        %s621 = smul.u32 32, %s17
        %p622 = scmp.lt.s32.totalorder %s621, 63
        %s623 = scalar_select %p622, %s621, 63
        %s624 = smul.addr %s623, 8
        %s625 = scalar_lea.vmem %s3, %s624
        // Predicated region
        $region37: #{bottleneck_forward.2} parent=31 // pred_check
          %p626 = pneg %p103
        $region38: #{bottleneck_forward.2} parent=31 // pred_check_branch
          %628 = sbr.rel (%p626) target = $region40
        $region39: #{bottleneck_forward.2} parent=31 // pred_region
          %s629 = smul.u32 32, %s17
        $region40: #{bottleneck_forward.2} parent=31 // pred_fallthru
          _
      $region32: #{bottleneck_forward.2} parent=5 // pred_fallthru
        _
      %p630 = scmp.le.s32.totalorder 2, %s12
      // Predicated region
      $region41: #{bottleneck_forward.2} parent=5 // pred_check
        %p631 = pneg %p630
      $region42: #{bottleneck_forward.2} parent=5 // pred_check_branch
        %633 = sbr.rel (%p631) target = $region44
      $region43: #{bottleneck_forward.2} parent=5 // pred_region
        %s634 = ssub.s32 %s12, 2
        // Predicated region
        $region45: #{bottleneck_forward.2} parent=43 // pred_check
          %p635 = pneg %p109
        $region46: #{bottleneck_forward.2} parent=43 // pred_check_branch
          %637 = sbr.rel (%p635) target = $region48
        $region47: #{bottleneck_forward.2} parent=43 // pred_region
          %s638 = smul.u32 32, %s18
          %p639 = scmp.lt.s32.totalorder %s638, 63
          %s640 = scalar_select %p639, %s638, 63
          %s641 = smul.addr %s640, 8
          %s642 = scalar_lea.vmem %s3, %s641
        $region48: #{bottleneck_forward.2} parent=43 // pred_fallthru
          _
      $region44: #{bottleneck_forward.2} parent=5 // pred_fallthru
        _
    $region6: #{bottleneck_forward.2} parent=1 // loop_footer
      %s16 = sadd.s32 1, %s12
    $region7: #{bottleneck_forward.2} parent=1 // loop_footer_branch
      %11 = sbr.rel target = $region3
    $region8: #{bottleneck_forward.2} parent=1 // loop_exit
      _
    %643 = vsyncpa [#allocation3], 1
    %s644 = scalar_lea.sflag [#allocation3], 1
    %645 = vsyncpa %s644, 1

// kernel: bottleneck_forward.3
$region0: #{bottleneck_forward.3}
  #allocation0 [shape = 'u32[]', space=smem, size = 0x4, offset = 0x4, fixed_abs, tag = 'smem constant byte address 0x4 - core index']
  #allocation1 [shape = 'u32[144,128]{1,0:T(1,128)}', space=vmem, size = 0x12000, scoped, tag = 'internal scratch']
  #allocation2 [shape = 'f32[64,4]{1,0:T(8,128)}', space=vmem, size = 0x8000, scoped, tag = 'scratch operand']
  %s0 = inlined_call_operand.vmem [shape: f32[2,6,10,10,4], index: 0, kind: input, shape index: {}]
  %s1 = inlined_call_operand.vmem [shape: f32[2,4,64,16], index: 1, kind: input, shape index: {}]
  %s2 = inlined_call_operand.vmem [shape: f32[3,36,4], index: 2, kind: input, shape index: {}]
  %s3 = inlined_call_operand.vmem [shape: f32[1,4], index: 3, kind: input, shape index: {}]
  %s4 = inlined_call_operand.vmem [shape: f32[4,16], index: 4, kind: input, shape index: {}]
  %s5 = inlined_call_operand.vmem [shape: f32[1,16], index: 5, kind: input, shape index: {}]
  %s6 = inlined_call_operand.hbm [shape: f32[2,4,64,16], index: 6, kind: output, shape index: {}]
  %s7 = sld [smem:[#allocation0]]
  $region65: #{bottleneck_forward.3} parent=0
    _
  %s9 = ssub.s32 1, %s7
  %s10 = scalar_select 0, %s9, %s7
  $region1: #{bottleneck_forward.3} parent=0
    #allocation3 [shape = 'u8[65536]{0}', space=vmem, size = 0x10000, scoped, tag = 'output window, operand 0']
    #allocation4 [shape = 's32[2]{0}', space=sflag, size = 0x8, scoped, tag = 'scoped memory for bottleneck_forward.3']
    %11 = vsyncpa [#allocation4], 0
    %s12 = scalar_lea.sflag [#allocation4], 1
    %13 = vsyncpa %s12, 0
    loop: start=0, step=1, limit=26
    $region2: #{bottleneck_forward.3} parent=1 // loop_pre_header
      _
    $region3: #{bottleneck_forward.3} parent=1 // loop_header
      %s15 = sphi 0, %s19
      %p16 = scmp.ge.s32.totalorder %s15, 26
      %s22 = sphi 0, %s41
      %s23 = sphi 0, %s37
      %s24 = sphi 0, %s33
      %s25 = sphi 0, %s22
      %s26 = sphi 0, %s23
      %s27 = sphi 0, %s24
      %s28 = sphi 0, %s25
      %s29 = sphi 0, %s26
      %s30 = sphi 0, %s27
      %s48 = sphi 0, %s50
      %s51 = sphi 0, %s48
      %s52 = sphi 0, %s51
      %s68 = sphi 0, %s52
      %s76 = sphi 0, %s78
      %s79 = sphi 0, %s76
      %s80 = sphi 0, %s79
      %s96 = sphi 0, %s80
      %s102 = sphi 0, %s104
      %s105 = sphi 0, %s102
      %s106 = sphi 0, %s105
      %s122 = sphi 0, %s106
      %s126 = sphi 0, %s126
      %s128 = sphi 0, %s126
      %s129 = sphi 0, %s128
      %s143 = sphi 0, %s129
      %s147 = sphi 0, %s147
      %s149 = sphi 0, %s147
      %s150 = sphi 0, %s149
      %s164 = sphi 0, %s150
      %s168 = sphi 0, %s168
      %s170 = sphi 0, %s168
      %s171 = sphi 0, %s170
      %s185 = sphi 0, %s171
      %s193 = sphi 0, %s195
      %s196 = sphi 0, %s193
      %s197 = sphi 0, %s196
      %s213 = sphi 0, %s197
    $region4: #{bottleneck_forward.3} parent=1 // loop_header_branch
      %18 = sbr.rel (%p16) target = $region8
    $region5: #{bottleneck_forward.3} parent=1 // loop_body
      %s20 = ssub.s32 %s15, 1
      %s21 = ssub.s32 %s15, 2
      %s31 = sadd.s32 1, %s24
      %p32 = scmp.ge.s32.totalorder %s31, 3
      %s33 = scalar_select %p32, 0, %s31
      %s34 = sadd.s32 1, %s23
      %s35 = scalar_select %p32, %s34, %s23
      %p36 = scmp.ge.s32.totalorder %s35, 4
      %s37 = scalar_select %p36, 0, %s35
      %s38 = sadd.s32 1, %s22
      %s39 = scalar_select %p36, %s38, %s22
      %p40 = scmp.ge.s32.totalorder %s39, 2
      %s41 = scalar_select %p40, 0, %s39
      %s42 = sadd.s32 %s23, %s24
      %s43 = sadd.s32 %s37, %s33
      %s44 = ssub.s32 %s22, %s41
      %s45 = ssub.s32 %s42, %s43
      %s46 = sor.u32 %s44, %s45
      %p47 = scmp.eq.s32.totalorder %s46, 0
      %s49 = sadd.s32 %s48, 1
      %s50 = scalar_select %p47, %s48, %s49
      %p53 = pneg %p47
      %p54 = scmp.eq.s32.totalorder %s15, 23
      %p55 = por %p53, %p54
      %p56 = scmp.ne.s32.totalorder %s48, %s51
      %p57 = scmp.eq.s32.totalorder %s15, 0
      %p58 = por %p56, %p57
      %p59 = scmp.ne.s32.totalorder %s48, %s51
      %p60 = scmp.eq.s32.totalorder %s20, 23
      %p61 = por %p59, %p60
      %p62 = scmp.ne.s32.totalorder %s51, %s52
      %p63 = scmp.eq.s32.totalorder %s20, 0
      %p64 = por %p62, %p63
      %p65 = scmp.ne.s32.totalorder %s51, %s52
      %p66 = scmp.eq.s32.totalorder %s21, 23
      %p67 = por %p65, %p66
      %p69 = scmp.ne.s32.totalorder %s52, %s68
      %p70 = scmp.eq.s32.totalorder %s21, 0
      %p71 = por %p69, %p70
      %s72 = ssub.s32 %s22, %s41
      %s73 = ssub.s32 %s23, %s37
      %s74 = sor.u32 %s72, %s73
      %p75 = scmp.eq.s32.totalorder %s74, 0
      %s77 = sadd.s32 %s76, 1
      %s78 = scalar_select %p75, %s76, %s77
      %p81 = pneg %p75
      %p82 = scmp.eq.s32.totalorder %s15, 23
      %p83 = por %p81, %p82
      %p84 = scmp.ne.s32.totalorder %s76, %s79
      %p85 = scmp.eq.s32.totalorder %s15, 0
      %p86 = por %p84, %p85
      %p87 = scmp.ne.s32.totalorder %s76, %s79
      %p88 = scmp.eq.s32.totalorder %s20, 23
      %p89 = por %p87, %p88
      %p90 = scmp.ne.s32.totalorder %s79, %s80
      %p91 = scmp.eq.s32.totalorder %s20, 0
      %p92 = por %p90, %p91
      %p93 = scmp.ne.s32.totalorder %s79, %s80
      %p94 = scmp.eq.s32.totalorder %s21, 23
      %p95 = por %p93, %p94
      %p97 = scmp.ne.s32.totalorder %s80, %s96
      %p98 = scmp.eq.s32.totalorder %s21, 0
      %p99 = por %p97, %p98
      %s100 = ssub.s32 %s24, %s33
      %p101 = scmp.eq.s32.totalorder %s100, 0
      %s103 = sadd.s32 %s102, 1
      %s104 = scalar_select %p101, %s102, %s103
      %p107 = pneg %p101
      %p108 = scmp.eq.s32.totalorder %s15, 23
      %p109 = por %p107, %p108
      %p110 = scmp.ne.s32.totalorder %s102, %s105
      %p111 = scmp.eq.s32.totalorder %s15, 0
      %p112 = por %p110, %p111
      %p113 = scmp.ne.s32.totalorder %s102, %s105
      %p114 = scmp.eq.s32.totalorder %s20, 23
      %p115 = por %p113, %p114
      %p116 = scmp.ne.s32.totalorder %s105, %s106
      %p117 = scmp.eq.s32.totalorder %s20, 0
      %p118 = por %p116, %p117
      %p119 = scmp.ne.s32.totalorder %s105, %s106
      %p120 = scmp.eq.s32.totalorder %s21, 23
      %p121 = por %p119, %p120
      %p123 = scmp.ne.s32.totalorder %s106, %s122
      %p124 = scmp.eq.s32.totalorder %s21, 0
      %p125 = por %p123, %p124
      %s127 = sadd.s32 %s126, 1
      %p130 = scmp.eq.s32.totalorder %s15, 23
      %p131 = scmp.ne.s32.totalorder %s126, %s128
      %p132 = scmp.eq.s32.totalorder %s15, 0
      %p133 = por %p131, %p132
      %p134 = scmp.ne.s32.totalorder %s126, %s128
      %p135 = scmp.eq.s32.totalorder %s20, 23
      %p136 = por %p134, %p135
      %p137 = scmp.ne.s32.totalorder %s128, %s129
      %p138 = scmp.eq.s32.totalorder %s20, 0
      %p139 = por %p137, %p138
      %p140 = scmp.ne.s32.totalorder %s128, %s129
      %p141 = scmp.eq.s32.totalorder %s21, 23
      %p142 = por %p140, %p141
      %p144 = scmp.ne.s32.totalorder %s129, %s143
      %p145 = scmp.eq.s32.totalorder %s21, 0
      %p146 = por %p144, %p145
      %s148 = sadd.s32 %s147, 1
      %p151 = scmp.eq.s32.totalorder %s15, 23
      %p152 = scmp.ne.s32.totalorder %s147, %s149
      %p153 = scmp.eq.s32.totalorder %s15, 0
      %p154 = por %p152, %p153
      %p155 = scmp.ne.s32.totalorder %s147, %s149
      %p156 = scmp.eq.s32.totalorder %s20, 23
      %p157 = por %p155, %p156
      %p158 = scmp.ne.s32.totalorder %s149, %s150
      %p159 = scmp.eq.s32.totalorder %s20, 0
      %p160 = por %p158, %p159
      %p161 = scmp.ne.s32.totalorder %s149, %s150
      %p162 = scmp.eq.s32.totalorder %s21, 23
      %p163 = por %p161, %p162
      %p165 = scmp.ne.s32.totalorder %s150, %s164
      %p166 = scmp.eq.s32.totalorder %s21, 0
      %p167 = por %p165, %p166
      %s169 = sadd.s32 %s168, 1
      %p172 = scmp.eq.s32.totalorder %s15, 23
      %p173 = scmp.ne.s32.totalorder %s168, %s170
      %p174 = scmp.eq.s32.totalorder %s15, 0
      %p175 = por %p173, %p174
      %p176 = scmp.ne.s32.totalorder %s168, %s170
      %p177 = scmp.eq.s32.totalorder %s20, 23
      %p178 = por %p176, %p177
      %p179 = scmp.ne.s32.totalorder %s170, %s171
      %p180 = scmp.eq.s32.totalorder %s20, 0
      %p181 = por %p179, %p180
      %p182 = scmp.ne.s32.totalorder %s170, %s171
      %p183 = scmp.eq.s32.totalorder %s21, 23
      %p184 = por %p182, %p183
      %p186 = scmp.ne.s32.totalorder %s171, %s185
      %p187 = scmp.eq.s32.totalorder %s21, 0
      %p188 = por %p186, %p187
      %s189 = ssub.s32 %s22, %s41
      %s190 = ssub.s32 %s23, %s37
      %s191 = sor.u32 %s189, %s190
      %p192 = scmp.eq.s32.totalorder %s191, 0
      %s194 = sadd.s32 %s193, 1
      %s195 = scalar_select %p192, %s193, %s194
      %p198 = pneg %p192
      %p199 = scmp.eq.s32.totalorder %s15, 23
      %p200 = por %p198, %p199
      %p201 = scmp.ne.s32.totalorder %s193, %s196
      %p202 = scmp.eq.s32.totalorder %s15, 0
      %p203 = por %p201, %p202
      %p204 = scmp.ne.s32.totalorder %s193, %s196
      %p205 = scmp.eq.s32.totalorder %s20, 23
      %p206 = por %p204, %p205
      %p207 = scmp.ne.s32.totalorder %s196, %s197
      %p208 = scmp.eq.s32.totalorder %s20, 0
      %p209 = por %p207, %p208
      %p210 = scmp.ne.s32.totalorder %s196, %s197
      %p211 = scmp.eq.s32.totalorder %s21, 23
      %p212 = por %p210, %p211
      %p214 = scmp.ne.s32.totalorder %s197, %s213
      %p215 = scmp.eq.s32.totalorder %s21, 0
      %p216 = por %p214, %p215
      %p217 = scmp.le.s32.totalorder 1, %s15
      %p218 = scmp.lt.s32.totalorder %s15, 25
      %p219 = pnand %p217, %p218
      %p220 = pneg %p219
      // Predicated region
      $region9: #{bottleneck_forward.3} parent=5 // pred_check
        _
      $region10: #{bottleneck_forward.3} parent=5 // pred_check_branch
        %222 = sbr.rel (%p219) target = $region12
      $region11: #{bottleneck_forward.3} parent=5 // pred_region
        %s223 = ssub.s32 %s15, 1
        // Predicated region
        $region13: #{bottleneck_forward.3} parent=11 // pred_check
          %p224 = pneg %p139
        $region14: #{bottleneck_forward.3} parent=11 // pred_check_branch
          %226 = sbr.rel (%p224) target = $region16
        $region15: #{bottleneck_forward.3} parent=11 // pred_region
          _
        $region16: #{bottleneck_forward.3} parent=11 // pred_fallthru
          _
        // Predicated region
        $region17: #{bottleneck_forward.3} parent=11 // pred_check
          %p227 = pneg %p160
        $region18: #{bottleneck_forward.3} parent=11 // pred_check_branch
          %229 = sbr.rel (%p227) target = $region20
        $region19: #{bottleneck_forward.3} parent=11 // pred_region
          _
        $region20: #{bottleneck_forward.3} parent=11 // pred_fallthru
          _
        // Predicated region
        $region21: #{bottleneck_forward.3} parent=11 // pred_check
          %p230 = pneg %p181
        $region22: #{bottleneck_forward.3} parent=11 // pred_check_branch
          %232 = sbr.rel (%p230) target = $region24
        $region23: #{bottleneck_forward.3} parent=11 // pred_region
          _
        $region24: #{bottleneck_forward.3} parent=11 // pred_fallthru
          _
      $region12: #{bottleneck_forward.3} parent=5 // pred_fallthru
        _
      %p233 = scmp.lt.s32.totalorder %s15, 24
      // Predicated region
      $region25: #{bottleneck_forward.3} parent=5 // pred_check
        %p234 = pneg %p233
      $region26: #{bottleneck_forward.3} parent=5 // pred_check_branch
        %236 = sbr.rel (%p234) target = $region28
      $region27: #{bottleneck_forward.3} parent=5 // pred_region
        // Predicated region
        $region29: #{bottleneck_forward.3} parent=27 // pred_check
          %p237 = pneg %p58
        $region30: #{bottleneck_forward.3} parent=27 // pred_check_branch
          %239 = sbr.rel (%p237) target = $region32
        $region31: #{bottleneck_forward.3} parent=27 // pred_region
          %s240 = sadd.s32 %s23, %s24
          %p241 = scmp.lt.s32.totalorder %s22, 1
          %s242 = scalar_select %p241, %s22, 1
          %p243 = scmp.lt.s32.totalorder %s240, 5
          %s244 = scalar_select %p243, %s240, 5
          %s245 = smul.addr %s244, 20
          %s246 = smul.addr %s242, 120
          %s247 = sadd.s32 %s245, %s246
          %s248 = smul.addr %s247, 8
          %s249 = scalar_lea.vmem %s0, %s248
          %s250 = sadd.s32 %s23, %s24
        $region32: #{bottleneck_forward.3} parent=27 // pred_fallthru
          _
        // Predicated region
        $region33: #{bottleneck_forward.3} parent=27 // pred_check
          %p251 = pneg %p86
        $region34: #{bottleneck_forward.3} parent=27 // pred_check_branch
          %253 = sbr.rel (%p251) target = $region36
        $region35: #{bottleneck_forward.3} parent=27 // pred_region
          %p254 = scmp.lt.s32.totalorder %s22, 1
          %s255 = scalar_select %p254, %s22, 1
          %p256 = scmp.lt.s32.totalorder %s23, 3
          %s257 = scalar_select %p256, %s23, 3
          %s258 = smul.addr %s257, 8
          %s259 = smul.addr %s255, 32
          %s260 = sadd.s32 %s258, %s259
          %s261 = smul.addr %s260, 8
          %s262 = scalar_lea.vmem %s1, %s261
        $region36: #{bottleneck_forward.3} parent=27 // pred_fallthru
          _
        // Predicated region
        $region37: #{bottleneck_forward.3} parent=27 // pred_check
          %p263 = pneg %p112
        $region38: #{bottleneck_forward.3} parent=27 // pred_check_branch
          %265 = sbr.rel (%p263) target = $region40
        $region39: #{bottleneck_forward.3} parent=27 // pred_region
          %p266 = scmp.lt.s32.totalorder %s24, 2
          %s267 = scalar_select %p266, %s24, 2
          %s268 = smul.addr %s267, 5
          %s269 = smul.addr %s268, 8
          %s270 = scalar_lea.vmem %s2, %s269
        $region40: #{bottleneck_forward.3} parent=27 // pred_fallthru
          _
      $region28: #{bottleneck_forward.3} parent=5 // pred_fallthru
        _
      %p271 = scmp.le.s32.totalorder 1, %s15
      %p272 = scmp.lt.s32.totalorder %s15, 25
      %p273 = pnand %p271, %p272
      %p274 = pneg %p273
      // Predicated region
      $region41: #{bottleneck_forward.3} parent=5 // pred_check
        _
      $region42: #{bottleneck_forward.3} parent=5 // pred_check_branch
        %276 = sbr.rel (%p273) target = $region44
      $region43: #{bottleneck_forward.3} parent=5 // pred_region
        %s277 = ssub.s32 %s15, 1
        %s278 = sadd.s32 %s26, %s27
        %p279 = scmp.lt.s32.totalorder %s25, 1
        %s280 = scalar_select %p279, %s25, 1
        %p281 = scmp.lt.s32.totalorder %s278, 5
        %s282 = scalar_select %p281, %s278, 5
        %s283 = smul.addr %s282, 20
        %s284 = smul.addr %s280, 120
        %s285 = sadd.s32 %s283, %s284
        %s286 = smul.addr %s285, 8
        %s287 = scalar_lea.vmem %s0, %s286
        %p288 = pneg %p64
        %p289 = pneg %p61
        %p290 = scmp.lt.s32.totalorder %s25, 1
        %s291 = scalar_select %p290, %s25, 1
        %p292 = scmp.lt.s32.totalorder %s26, 3
        %s293 = scalar_select %p292, %s26, 3
        %s294 = smul.addr %s293, 8
        %s295 = smul.addr %s291, 32
        %s296 = sadd.s32 %s294, %s295
        %s297 = smul.addr %s296, 8
        %s298 = scalar_lea.vmem %s1, %s297
        %p299 = pneg %p92
        %p300 = pneg %p89
        %p301 = scmp.lt.s32.totalorder %s27, 2
        %s302 = scalar_select %p301, %s27, 2
        %s303 = smul.addr %s302, 5
        %s304 = smul.addr %s303, 8
        %s305 = scalar_lea.vmem %s2, %s304
        %p306 = pneg %p118
        %p307 = pneg %p115
        %p308 = pneg %p139
        %p309 = pneg %p136
        %p310 = pneg %p160
        %p311 = pneg %p157
        %p312 = pneg %p181
        %p313 = pneg %p178
        %p314 = pneg %p209
        %p315 = pneg %p206
        %s316 = sand.u32 %s196, 1
        %s317 = scalar_lea.sflag [#allocation4], %s316
        %s318 = sand.u32 %s196, 1
        %s319 = smul.addr %s318, 64
        %s320 = scalar_lea.vmem [#allocation3], %s319
        %s321 = sadd.s32 %s26, %s27
        %p322 = scmp.lt.s32.totalorder %s25, 1
        %s323 = scalar_select %p322, %s25, 1
        %p324 = scmp.lt.s32.totalorder %s321, 5
        %s325 = scalar_select %p324, %s321, 5
        %s326 = smul.addr %s325, 20
        %s327 = smul.addr %s323, 120
        %s328 = sadd.s32 %s326, %s327
        %s329 = smul.addr %s328, 8
        %s330 = scalar_lea.vmem %s0, %s329
        %s331 = sadd.s32 %s26, %s27
        %p332 = scmp.lt.s32.totalorder %s25, 1
        %s333 = scalar_select %p332, %s25, 1
        %p334 = scmp.lt.s32.totalorder %s26, 3
        %s335 = scalar_select %p334, %s26, 3
        %s336 = smul.addr %s335, 8
        %s337 = smul.addr %s333, 32
        %s338 = sadd.s32 %s336, %s337
        %s339 = smul.addr %s338, 8
        %s340 = scalar_lea.vmem %s1, %s339
        %p341 = scmp.lt.s32.totalorder %s27, 2
        %s342 = scalar_select %p341, %s27, 2
        %s343 = smul.addr %s342, 5
        %s344 = smul.addr %s343, 8
        %s345 = scalar_lea.vmem %s2, %s344
        %p346 = scmp.eq.s32.totalorder %s27, 0
        // Predicated region
        $region45: #{bottleneck_forward.3} parent=43 // pred_check
          %p347 = pneg %p346
        $region46: #{bottleneck_forward.3} parent=43 // pred_check_branch
          %349 = sbr.rel (%p347) target = $region48
        $region47: #{bottleneck_forward.3} parent=43 // pred_region
          %vm350 = vcmask 31744
          %351 = vst.msk [vmem:[#allocation2] sm:$0xff] %vm350, 0.0
          %352 = vst.msk [vmem:[#allocation2 + $0x8] sm:$0xff] %vm350, 0.0
          %353 = vst.msk [vmem:[#allocation2 + $0x10] sm:$0xff] %vm350, 0.0
          %354 = vst.msk [vmem:[#allocation2 + $0x18] sm:$0xff] %vm350, 0.0
          %355 = vst.msk [vmem:[#allocation2 + $0x20] sm:$0xff] %vm350, 0.0
          %356 = vst.msk [vmem:[#allocation2 + $0x28] sm:$0xff] %vm350, 0.0
          %357 = vst.msk [vmem:[#allocation2 + $0x30] sm:$0xff] %vm350, 0.0
          %358 = vst.msk [vmem:[#allocation2 + $0x38] sm:$0xff] %vm350, 0.0
        $region48: #{bottleneck_forward.3} parent=43 // pred_fallthru
          _
        %v359 = vld [vmem:[%s330] sm:$0xff]
        %v360 = vld [vmem:[%s330 + $0x8] sm:$0x3]
        %v361 = vld [vmem:[%s330 + $0x10] sm:$0xff]
        %v362 = vld [vmem:[%s330 + $0x18] sm:$0x3]
        %v363 = vld [vmem:[%s330 + $0x20] sm:$0xff]
        %v364 = vld [vmem:[%s330 + $0x28] sm:$0x3]
        %v365 = vld [vmem:[%s330 + $0x30] sm:$0xff]
        %v366 = vld [vmem:[%s330 + $0x38] sm:$0x3]
        %v367 = vld [vmem:[%s330 + $0x40] sm:$0xff]
        %v368 = vld [vmem:[%s330 + $0x48] sm:$0x3]
        %v369 = vld [vmem:[%s330 + $0x50] sm:$0xff]
        %v370 = vld [vmem:[%s330 + $0x58] sm:$0x3]
        %v371 = vld [vmem:[%s330 + $0x60] sm:$0xff]
        %v372 = vld [vmem:[%s330 + $0x68] sm:$0x3]
        %v373 = vld [vmem:[%s330 + $0x70] sm:$0xff]
        %v374 = vld [vmem:[%s330 + $0x78] sm:$0x3]
        %v375 = vld [vmem:[%s330 + $0x80] sm:$0xff]
        %v376 = vld [vmem:[%s330 + $0x88] sm:$0x3]
        %v377 = vld [vmem:[%s330 + $0x90] sm:$0xff]
        %v378 = vld [vmem:[%s330 + $0x98] sm:$0x3]
        %v379 = vld [vmem:[#allocation2] sm:$0xff]
        %v380 = vld [vmem:[#allocation2 + $0x8] sm:$0xff]
        %v381 = vld [vmem:[#allocation2 + $0x10] sm:$0xff]
        %v382 = vld [vmem:[#allocation2 + $0x18] sm:$0xff]
        %v383 = vld [vmem:[#allocation2 + $0x20] sm:$0xff]
        %v384 = vld [vmem:[#allocation2 + $0x28] sm:$0xff]
        %v385 = vld [vmem:[#allocation2 + $0x30] sm:$0xff]
        %v386 = vld [vmem:[#allocation2 + $0x38] sm:$0xff]
        %v387 = vld [vmem:[%s345] sm:$0xf]
        %vm388 = vcmask 31744
        %v390 = vsel %vm388, %v359, 0
        %v393 = vsel %vm388, %v361, 0
        %v396 = vsel %vm388, %v363, 0
        %v399 = vsel %vm388, %v365, 0
        %v402 = vsel %vm388, %v367, 0
        %v405 = vsel %vm388, %v369, 0
        %v408 = vsel %vm388, %v371, 0
        %v411 = vsel %vm388, %v373, 0
        %vm413 = vcmask 1043456
        %v415 = vsel %vm413, %v387, 0
        %417 = vmatprep.subr.mxu0 0.0
        %418 = vmatpush1.msra.mxu0 0.0
        %419 = vmatprep.subr.mxu0 0.0
        %420 = vmatpush1.msra.mxu0 0.0
        %421 = vmatprep.subr.mxu0 0.0
        %422 = vmatpush1.msra.mxu0 0.0
        %423 = vmatprep.subr.mxu0 0.0
        %424 = vmatpush1.msra.mxu0 0.0
        %425 = vmatprep.subr.mxu0 0.0
        %426 = vmatpush1.msra.mxu0 0.0
        %427 = vmatprep.subr.mxu0 0.0
        %428 = vmatpush1.msra.mxu0 0.0
        %429 = vmatprep.subr.mxu0 0.0
        %430 = vmatpush1.msra.mxu0 0.0
        %431 = vmatprep.subr.mxu0 0.0
        %432 = vmatpush1.msra.mxu0 0.0
        %433 = vmatprep.subr.mxu0 0.0
        %434 = vmatpush1.msra.mxu0 0.0
        %435 = vmatprep.subr.mxu0 0.0
        %436 = vmatpush1.msra.mxu0 0.0
        %437 = vmatprep.subr.mxu0 0.0
        %438 = vmatpush1.msra.mxu0 0.0
        %439 = vmatprep.subr.mxu0 0.0
        %440 = vmatpush1.msra.mxu0 0.0
        %441 = vmatprep.subr.mxu0 0.0
        %442 = vmatpush1.msra.mxu0 0.0
        %443 = vmatprep.subr.mxu0 0.0
        %444 = vmatpush1.msra.mxu0 0.0
        %445 = vmatprep.subr.mxu0 0.0
        %446 = vmatpush1.msra.mxu0 0.0
        %447 = vmatprep.subr.mxu0 0.0
        %448 = vmatpush1.msra.mxu0 %v415
        %449 = vmatprep.subr.mxu0 0.0
        %450 = vmatpush2.msra.mxu0 0.0
        %451 = vmatprep.subr.mxu0 0.0
        %452 = vmatpush2.msra.mxu0 0.0
        %453 = vmatprep.subr.mxu0 0.0
        %454 = vmatpush2.msra.mxu0 0.0
        %455 = vmatprep.subr.mxu0 0.0
        %456 = vmatpush2.msra.mxu0 0.0
        %457 = vmatprep.subr.mxu0 0.0
        %458 = vmatpush2.msra.mxu0 0.0
        %459 = vmatprep.subr.mxu0 0.0
        %460 = vmatpush2.msra.mxu0 0.0
        %461 = vmatprep.subr.mxu0 0.0
        %462 = vmatpush2.msra.mxu0 0.0
        %463 = vmatprep.subr.mxu0 0.0
        %464 = vmatpush2.msra.mxu0 0.0
        %465 = vmatprep.subr.mxu0 0.0
        %466 = vmatpush2.msra.mxu0 0.0
        %467 = vmatprep.subr.mxu0 0.0
        %468 = vmatpush2.msra.mxu0 0.0
        %469 = vmatprep.subr.mxu0 0.0
        %470 = vmatpush2.msra.mxu0 0.0
        %471 = vmatprep.subr.mxu0 0.0
        %472 = vmatpush2.msra.mxu0 0.0
        %473 = vmatprep.subr.mxu0 0.0
        %474 = vmatpush2.msra.mxu0 0.0
        %475 = vmatprep.subr.mxu0 0.0
        %476 = vmatpush2.msra.mxu0 0.0
        %477 = vmatprep.subr.mxu0 0.0
        %478 = vmatpush2.msra.mxu0 0.0
        %479 = vmatprep.subr.mxu0 0.0
        %480 = vmatpush2.msra.mxu0 0.0
        %481 = vmatprep.mubr.f32.mxu0 0.0
        %482 = vmatmul.mubr.f32.gmra.mxu0 %v390
        %v483 = vpop.f32.mrf.mxu0
        %v484 = vadd.f32 0.0, %v483
        %v485 = vpop.f32.mrf.mxu0
        %486 = vmatprep.mubr.f32.mxu0 0.0
        %487 = vmatmul.mubr.f32.gmra.mxu0 %v393
        %v488 = vpop.f32.mrf.mxu0
        %v489 = vadd.f32 0.0, %v488
        %v490 = vpop.f32.mrf.mxu0
        %491 = vmatprep.mubr.f32.mxu0 0.0
        %492 = vmatmul.mubr.f32.gmra.mxu0 %v396
        %v493 = vpop.f32.mrf.mxu0
        %v494 = vadd.f32 0.0, %v493
        %v495 = vpop.f32.mrf.mxu0
        %496 = vmatprep.mubr.f32.mxu0 0.0
        %497 = vmatmul.mubr.f32.gmra.mxu0 %v399
        %v498 = vpop.f32.mrf.mxu0
        %v499 = vadd.f32 0.0, %v498
        %v500 = vpop.f32.mrf.mxu0
        %501 = vmatprep.mubr.f32.mxu0 0.0
        %502 = vmatmul.mubr.f32.gmra.mxu0 %v402
        %v503 = vpop.f32.mrf.mxu0
        %v504 = vadd.f32 0.0, %v503
        %v505 = vpop.f32.mrf.mxu0
        %506 = vmatprep.mubr.f32.mxu0 0.0
        %507 = vmatmul.mubr.f32.gmra.mxu0 %v405
        %v508 = vpop.f32.mrf.mxu0
        %v509 = vadd.f32 0.0, %v508
        %v510 = vpop.f32.mrf.mxu0
        %511 = vmatprep.mubr.f32.mxu0 0.0
        %512 = vmatmul.mubr.f32.gmra.mxu0 %v408
        %v513 = vpop.f32.mrf.mxu0
        %v514 = vadd.f32 0.0, %v513
        %v515 = vpop.f32.mrf.mxu0
        %516 = vmatprep.mubr.f32.mxu0 0.0
        %517 = vmatmul.mubr.f32.gmra.mxu0 %v411
        %v518 = vpop.f32.mrf.mxu0
        %v519 = vadd.f32 0.0, %v518
        %v520 = vpop.f32.mrf.mxu0
        %521 = vdwg.mxu0
        %v522 = vadd.f32 %v379, %v484
        %v523 = vadd.f32 %v380, %v489
        %v524 = vadd.f32 %v381, %v494
        %v525 = vadd.f32 %v382, %v499
        %v526 = vadd.f32 %v383, %v504
        %v527 = vadd.f32 %v384, %v509
        %v528 = vadd.f32 %v385, %v514
        %v529 = vadd.f32 %v386, %v519
        %vm538 = vcmask 1046528
        %v539 = vrot.slane %v359, 1
        %v540 = vrot.slane %v360, 1
        %v541 = vsel %vm538, %v539, %v540
        %v542 = vrot.slane %v361, 1
        %v543 = vrot.slane %v362, 1
        %v544 = vsel %vm538, %v542, %v543
        %v545 = vrot.slane %v363, 1
        %v546 = vrot.slane %v364, 1
        %v547 = vsel %vm538, %v545, %v546
        %v548 = vrot.slane %v365, 1
        %v549 = vrot.slane %v366, 1
        %v550 = vsel %vm538, %v548, %v549
        %v551 = vrot.slane %v367, 1
        %v552 = vrot.slane %v368, 1
        %v553 = vsel %vm538, %v551, %v552
        %v554 = vrot.slane %v369, 1
        %v555 = vrot.slane %v370, 1
        %v556 = vsel %vm538, %v554, %v555
        %v557 = vrot.slane %v371, 1
        %v558 = vrot.slane %v372, 1
        %v559 = vsel %vm538, %v557, %v558
        %v560 = vrot.slane %v373, 1
        %v561 = vrot.slane %v374, 1
        %v562 = vsel %vm538, %v560, %v561
        %v563 = vld [vmem:[%s345 + $0x4] sm:$0xf]
        %v564 = vsel %vm388, %v541, 0
        %v566 = vsel %vm388, %v544, 0
        %v568 = vsel %vm388, %v547, 0
        %v570 = vsel %vm388, %v550, 0
        %v572 = vsel %vm388, %v553, 0
        %v574 = vsel %vm388, %v556, 0
        %v576 = vsel %vm388, %v559, 0
        %v578 = vsel %vm388, %v562, 0
        %v581 = vsel %vm413, %v563, 0
        %583 = vmatprep.subr.mxu0 0.0
        %584 = vmatpush1.msra.mxu0 0.0
        %585 = vmatprep.subr.mxu0 0.0
        %586 = vmatpush1.msra.mxu0 0.0
        %587 = vmatprep.subr.mxu0 0.0
        %588 = vmatpush1.msra.mxu0 0.0
        %589 = vmatprep.subr.mxu0 0.0
        %590 = vmatpush1.msra.mxu0 0.0
        %591 = vmatprep.subr.mxu0 0.0
        %592 = vmatpush1.msra.mxu0 0.0
        %593 = vmatprep.subr.mxu0 0.0
        %594 = vmatpush1.msra.mxu0 0.0
        %595 = vmatprep.subr.mxu0 0.0
        %596 = vmatpush1.msra.mxu0 0.0
        %597 = vmatprep.subr.mxu0 0.0
        %598 = vmatpush1.msra.mxu0 0.0
        %599 = vmatprep.subr.mxu0 0.0
        %600 = vmatpush1.msra.mxu0 0.0
        %601 = vmatprep.subr.mxu0 0.0
        %602 = vmatpush1.msra.mxu0 0.0
        %603 = vmatprep.subr.mxu0 0.0
        %604 = vmatpush1.msra.mxu0 0.0
        %605 = vmatprep.subr.mxu0 0.0
        %606 = vmatpush1.msra.mxu0 0.0
        %607 = vmatprep.subr.mxu0 0.0
        %608 = vmatpush1.msra.mxu0 0.0
        %609 = vmatprep.subr.mxu0 0.0
        %610 = vmatpush1.msra.mxu0 0.0
        %611 = vmatprep.subr.mxu0 0.0
        %612 = vmatpush1.msra.mxu0 0.0
        %613 = vmatprep.subr.mxu0 0.0
        %614 = vmatpush1.msra.mxu0 %v581
        %615 = vmatprep.subr.mxu0 0.0
        %616 = vmatpush2.msra.mxu0 0.0
        %617 = vmatprep.subr.mxu0 0.0
        %618 = vmatpush2.msra.mxu0 0.0
        %619 = vmatprep.subr.mxu0 0.0
        %620 = vmatpush2.msra.mxu0 0.0
        %621 = vmatprep.subr.mxu0 0.0
        %622 = vmatpush2.msra.mxu0 0.0
        %623 = vmatprep.subr.mxu0 0.0
        %624 = vmatpush2.msra.mxu0 0.0
        %625 = vmatprep.subr.mxu0 0.0
        %626 = vmatpush2.msra.mxu0 0.0
        %627 = vmatprep.subr.mxu0 0.0
        %628 = vmatpush2.msra.mxu0 0.0
        %629 = vmatprep.subr.mxu0 0.0
        %630 = vmatpush2.msra.mxu0 0.0
        %631 = vmatprep.subr.mxu0 0.0
        %632 = vmatpush2.msra.mxu0 0.0
        %633 = vmatprep.subr.mxu0 0.0
        %634 = vmatpush2.msra.mxu0 0.0
        %635 = vmatprep.subr.mxu0 0.0
        %636 = vmatpush2.msra.mxu0 0.0
        %637 = vmatprep.subr.mxu0 0.0
        %638 = vmatpush2.msra.mxu0 0.0
        %639 = vmatprep.subr.mxu0 0.0
        %640 = vmatpush2.msra.mxu0 0.0
        %641 = vmatprep.subr.mxu0 0.0
        %642 = vmatpush2.msra.mxu0 0.0
        %643 = vmatprep.subr.mxu0 0.0
        %644 = vmatpush2.msra.mxu0 0.0
        %645 = vmatprep.subr.mxu0 0.0
        %646 = vmatpush2.msra.mxu0 0.0
        %647 = vmatprep.mubr.f32.mxu0 0.0
        %648 = vmatmul.mubr.f32.gmra.mxu0 %v564
        %v649 = vpop.f32.mrf.mxu0
        %v650 = vadd.f32 0.0, %v649
        %v651 = vpop.f32.mrf.mxu0
        %652 = vmatprep.mubr.f32.mxu0 0.0
        %653 = vmatmul.mubr.f32.gmra.mxu0 %v566
        %v654 = vpop.f32.mrf.mxu0
        %v655 = vadd.f32 0.0, %v654
        %v656 = vpop.f32.mrf.mxu0
        %657 = vmatprep.mubr.f32.mxu0 0.0
        %658 = vmatmul.mubr.f32.gmra.mxu0 %v568
        %v659 = vpop.f32.mrf.mxu0
        %v660 = vadd.f32 0.0, %v659
        %v661 = vpop.f32.mrf.mxu0
        %662 = vmatprep.mubr.f32.mxu0 0.0
        %663 = vmatmul.mubr.f32.gmra.mxu0 %v570
        %v664 = vpop.f32.mrf.mxu0
        %v665 = vadd.f32 0.0, %v664
        %v666 = vpop.f32.mrf.mxu0
        %667 = vmatprep.mubr.f32.mxu0 0.0
        %668 = vmatmul.mubr.f32.gmra.mxu0 %v572
        %v669 = vpop.f32.mrf.mxu0
        %v670 = vadd.f32 0.0, %v669
        %v671 = vpop.f32.mrf.mxu0
        %672 = vmatprep.mubr.f32.mxu0 0.0
        %673 = vmatmul.mubr.f32.gmra.mxu0 %v574
        %v674 = vpop.f32.mrf.mxu0
        %v675 = vadd.f32 0.0, %v674
        %v676 = vpop.f32.mrf.mxu0
        %677 = vmatprep.mubr.f32.mxu0 0.0
        %678 = vmatmul.mubr.f32.gmra.mxu0 %v576
        %v679 = vpop.f32.mrf.mxu0
        %v680 = vadd.f32 0.0, %v679
        %v681 = vpop.f32.mrf.mxu0
        %682 = vmatprep.mubr.f32.mxu0 0.0
        %683 = vmatmul.mubr.f32.gmra.mxu0 %v578
        %v684 = vpop.f32.mrf.mxu0
        %v685 = vadd.f32 0.0, %v684
        %v686 = vpop.f32.mrf.mxu0
        %687 = vdwg.mxu0
        %v688 = vadd.f32 %v522, %v650
        %v689 = vadd.f32 %v523, %v655
        %v690 = vadd.f32 %v524, %v660
        %v691 = vadd.f32 %v525, %v665
        %v692 = vadd.f32 %v526, %v670
        %v693 = vadd.f32 %v527, %v675
        %v694 = vadd.f32 %v528, %v680
        %v695 = vadd.f32 %v529, %v685
        %vm696 = vcmask 1045504
        %v697 = vrot.slane %v359, 2
        %v698 = vrot.slane %v360, 2
        %v699 = vsel %vm696, %v697, %v698
        %v700 = vrot.slane %v361, 2
        %v701 = vrot.slane %v362, 2
        %v702 = vsel %vm696, %v700, %v701
        %v703 = vrot.slane %v363, 2
        %v704 = vrot.slane %v364, 2
        %v705 = vsel %vm696, %v703, %v704
        %v706 = vrot.slane %v365, 2
        %v707 = vrot.slane %v366, 2
        %v708 = vsel %vm696, %v706, %v707
        %v709 = vrot.slane %v367, 2
        %v710 = vrot.slane %v368, 2
        %v711 = vsel %vm696, %v709, %v710
        %v712 = vrot.slane %v369, 2
        %v713 = vrot.slane %v370, 2
        %v714 = vsel %vm696, %v712, %v713
        %v715 = vrot.slane %v371, 2
        %v716 = vrot.slane %v372, 2
        %v717 = vsel %vm696, %v715, %v716
        %v718 = vrot.slane %v373, 2
        %v719 = vrot.slane %v374, 2
        %v720 = vsel %vm696, %v718, %v719
        %v721 = vld [vmem:[%s345 + $0x8] sm:$0xf]
        %v722 = vsel %vm388, %v699, 0
        %v724 = vsel %vm388, %v702, 0
        %v726 = vsel %vm388, %v705, 0
        %v728 = vsel %vm388, %v708, 0
        %v730 = vsel %vm388, %v711, 0
        %v732 = vsel %vm388, %v714, 0
        %v734 = vsel %vm388, %v717, 0
        %v736 = vsel %vm388, %v720, 0
        %v739 = vsel %vm413, %v721, 0
        %741 = vmatprep.subr.mxu0 0.0
        %742 = vmatpush1.msra.mxu0 0.0
        %743 = vmatprep.subr.mxu0 0.0
        %744 = vmatpush1.msra.mxu0 0.0
        %745 = vmatprep.subr.mxu0 0.0
        %746 = vmatpush1.msra.mxu0 0.0
        %747 = vmatprep.subr.mxu0 0.0
        %748 = vmatpush1.msra.mxu0 0.0
        %749 = vmatprep.subr.mxu0 0.0
        %750 = vmatpush1.msra.mxu0 0.0
        %751 = vmatprep.subr.mxu0 0.0
        %752 = vmatpush1.msra.mxu0 0.0
        %753 = vmatprep.subr.mxu0 0.0
        %754 = vmatpush1.msra.mxu0 0.0
        %755 = vmatprep.subr.mxu0 0.0
        %756 = vmatpush1.msra.mxu0 0.0
        %757 = vmatprep.subr.mxu0 0.0
        %758 = vmatpush1.msra.mxu0 0.0
        %759 = vmatprep.subr.mxu0 0.0
        %760 = vmatpush1.msra.mxu0 0.0
        %761 = vmatprep.subr.mxu0 0.0
        %762 = vmatpush1.msra.mxu0 0.0
        %763 = vmatprep.subr.mxu0 0.0
        %764 = vmatpush1.msra.mxu0 0.0
        %765 = vmatprep.subr.mxu0 0.0
        %766 = vmatpush1.msra.mxu0 0.0
        %767 = vmatprep.subr.mxu0 0.0
        %768 = vmatpush1.msra.mxu0 0.0
        %769 = vmatprep.subr.mxu0 0.0
        %770 = vmatpush1.msra.mxu0 0.0
        %771 = vmatprep.subr.mxu0 0.0
        %772 = vmatpush1.msra.mxu0 %v739
        %773 = vmatprep.subr.mxu0 0.0
        %774 = vmatpush2.msra.mxu0 0.0
        %775 = vmatprep.subr.mxu0 0.0
        %776 = vmatpush2.msra.mxu0 0.0
        %777 = vmatprep.subr.mxu0 0.0
        %778 = vmatpush2.msra.mxu0 0.0
        %779 = vmatprep.subr.mxu0 0.0
        %780 = vmatpush2.msra.mxu0 0.0
        %781 = vmatprep.subr.mxu0 0.0
        %782 = vmatpush2.msra.mxu0 0.0
        %783 = vmatprep.subr.mxu0 0.0
        %784 = vmatpush2.msra.mxu0 0.0
        %785 = vmatprep.subr.mxu0 0.0
        %786 = vmatpush2.msra.mxu0 0.0
        %787 = vmatprep.subr.mxu0 0.0
        %788 = vmatpush2.msra.mxu0 0.0
        %789 = vmatprep.subr.mxu0 0.0
        %790 = vmatpush2.msra.mxu0 0.0
        %791 = vmatprep.subr.mxu0 0.0
        %792 = vmatpush2.msra.mxu0 0.0
        %793 = vmatprep.subr.mxu0 0.0
        %794 = vmatpush2.msra.mxu0 0.0
        %795 = vmatprep.subr.mxu0 0.0
        %796 = vmatpush2.msra.mxu0 0.0
        %797 = vmatprep.subr.mxu0 0.0
        %798 = vmatpush2.msra.mxu0 0.0
        %799 = vmatprep.subr.mxu0 0.0
        %800 = vmatpush2.msra.mxu0 0.0
        %801 = vmatprep.subr.mxu0 0.0
        %802 = vmatpush2.msra.mxu0 0.0
        %803 = vmatprep.subr.mxu0 0.0
        %804 = vmatpush2.msra.mxu0 0.0
        %805 = vmatprep.mubr.f32.mxu0 0.0
        %806 = vmatmul.mubr.f32.gmra.mxu0 %v722
        %v807 = vpop.f32.mrf.mxu0
        %v808 = vadd.f32 0.0, %v807
        %v809 = vpop.f32.mrf.mxu0
        %810 = vmatprep.mubr.f32.mxu0 0.0
        %811 = vmatmul.mubr.f32.gmra.mxu0 %v724
        %v812 = vpop.f32.mrf.mxu0
        %v813 = vadd.f32 0.0, %v812
        %v814 = vpop.f32.mrf.mxu0
        %815 = vmatprep.mubr.f32.mxu0 0.0
        %816 = vmatmul.mubr.f32.gmra.mxu0 %v726
        %v817 = vpop.f32.mrf.mxu0
        %v818 = vadd.f32 0.0, %v817
        %v819 = vpop.f32.mrf.mxu0
        %820 = vmatprep.mubr.f32.mxu0 0.0
        %821 = vmatmul.mubr.f32.gmra.mxu0 %v728
        %v822 = vpop.f32.mrf.mxu0
        %v823 = vadd.f32 0.0, %v822
        %v824 = vpop.f32.mrf.mxu0
        %825 = vmatprep.mubr.f32.mxu0 0.0
        %826 = vmatmul.mubr.f32.gmra.mxu0 %v730
        %v827 = vpop.f32.mrf.mxu0
        %v828 = vadd.f32 0.0, %v827
        %v829 = vpop.f32.mrf.mxu0
        %830 = vmatprep.mubr.f32.mxu0 0.0
        %831 = vmatmul.mubr.f32.gmra.mxu0 %v732
        %v832 = vpop.f32.mrf.mxu0
        %v833 = vadd.f32 0.0, %v832
        %v834 = vpop.f32.mrf.mxu0
        %835 = vmatprep.mubr.f32.mxu0 0.0
        %836 = vmatmul.mubr.f32.gmra.mxu0 %v734
        %v837 = vpop.f32.mrf.mxu0
        %v838 = vadd.f32 0.0, %v837
        %v839 = vpop.f32.mrf.mxu0
        %840 = vmatprep.mubr.f32.mxu0 0.0
        %841 = vmatmul.mubr.f32.gmra.mxu0 %v736
        %v842 = vpop.f32.mrf.mxu0
        %v843 = vadd.f32 0.0, %v842
        %v844 = vpop.f32.mrf.mxu0
        %845 = vdwg.mxu0
        %v846 = vadd.f32 %v688, %v808
        %v847 = vadd.f32 %v689, %v813
        %v848 = vadd.f32 %v690, %v818
        %v849 = vadd.f32 %v691, %v823
        %v850 = vadd.f32 %v692, %v828
        %v851 = vadd.f32 %v693, %v833
        %v852 = vadd.f32 %v694, %v838
        %v853 = vadd.f32 %v695, %v843
        %v854 = vld [vmem:[%s345 + $0xc] sm:$0xf]
        %v856 = vsel %vm388, %v375, 0
        %v859 = vsel %vm413, %v854, 0
        %861 = vmatprep.subr.mxu0 0.0
        %862 = vmatpush1.msra.mxu0 0.0
        %863 = vmatprep.subr.mxu0 0.0
        %864 = vmatpush1.msra.mxu0 0.0
        %865 = vmatprep.subr.mxu0 0.0
        %866 = vmatpush1.msra.mxu0 0.0
        %867 = vmatprep.subr.mxu0 0.0
        %868 = vmatpush1.msra.mxu0 0.0
        %869 = vmatprep.subr.mxu0 0.0
        %870 = vmatpush1.msra.mxu0 0.0
        %871 = vmatprep.subr.mxu0 0.0
        %872 = vmatpush1.msra.mxu0 0.0
        %873 = vmatprep.subr.mxu0 0.0
        %874 = vmatpush1.msra.mxu0 0.0
        %875 = vmatprep.subr.mxu0 0.0
        %876 = vmatpush1.msra.mxu0 0.0
        %877 = vmatprep.subr.mxu0 0.0
        %878 = vmatpush1.msra.mxu0 0.0
        %879 = vmatprep.subr.mxu0 0.0
        %880 = vmatpush1.msra.mxu0 0.0
        %881 = vmatprep.subr.mxu0 0.0
        %882 = vmatpush1.msra.mxu0 0.0
        %883 = vmatprep.subr.mxu0 0.0
        %884 = vmatpush1.msra.mxu0 0.0
        %885 = vmatprep.subr.mxu0 0.0
        %886 = vmatpush1.msra.mxu0 0.0
        %887 = vmatprep.subr.mxu0 0.0
        %888 = vmatpush1.msra.mxu0 0.0
        %889 = vmatprep.subr.mxu0 0.0
        %890 = vmatpush1.msra.mxu0 0.0
        %891 = vmatprep.subr.mxu0 0.0
        %892 = vmatpush1.msra.mxu0 %v859
        %893 = vmatprep.subr.mxu0 0.0
        %894 = vmatpush2.msra.mxu0 0.0
        %895 = vmatprep.subr.mxu0 0.0
        %896 = vmatpush2.msra.mxu0 0.0
        %897 = vmatprep.subr.mxu0 0.0
        %898 = vmatpush2.msra.mxu0 0.0
        %899 = vmatprep.subr.mxu0 0.0
        %900 = vmatpush2.msra.mxu0 0.0
        %901 = vmatprep.subr.mxu0 0.0
        %902 = vmatpush2.msra.mxu0 0.0
        %903 = vmatprep.subr.mxu0 0.0
        %904 = vmatpush2.msra.mxu0 0.0
        %905 = vmatprep.subr.mxu0 0.0
        %906 = vmatpush2.msra.mxu0 0.0
        %907 = vmatprep.subr.mxu0 0.0
        %908 = vmatpush2.msra.mxu0 0.0
        %909 = vmatprep.subr.mxu0 0.0
        %910 = vmatpush2.msra.mxu0 0.0
        %911 = vmatprep.subr.mxu0 0.0
        %912 = vmatpush2.msra.mxu0 0.0
        %913 = vmatprep.subr.mxu0 0.0
        %914 = vmatpush2.msra.mxu0 0.0
        %915 = vmatprep.subr.mxu0 0.0
        %916 = vmatpush2.msra.mxu0 0.0
        %917 = vmatprep.subr.mxu0 0.0
        %918 = vmatpush2.msra.mxu0 0.0
        %919 = vmatprep.subr.mxu0 0.0
        %920 = vmatpush2.msra.mxu0 0.0
        %921 = vmatprep.subr.mxu0 0.0
        %922 = vmatpush2.msra.mxu0 0.0
        %923 = vmatprep.subr.mxu0 0.0
        %924 = vmatpush2.msra.mxu0 0.0
        %925 = vmatprep.mubr.f32.mxu0 0.0
        %926 = vmatmul.mubr.f32.gmra.mxu0 %v393
        %v927 = vpop.f32.mrf.mxu0
        %v928 = vadd.f32 0.0, %v927
        %v929 = vpop.f32.mrf.mxu0
        %930 = vmatprep.mubr.f32.mxu0 0.0
        %931 = vmatmul.mubr.f32.gmra.mxu0 %v396
        %v932 = vpop.f32.mrf.mxu0
        %v933 = vadd.f32 0.0, %v932
        %v934 = vpop.f32.mrf.mxu0
        %935 = vmatprep.mubr.f32.mxu0 0.0
        %936 = vmatmul.mubr.f32.gmra.mxu0 %v399
        %v937 = vpop.f32.mrf.mxu0
        %v938 = vadd.f32 0.0, %v937
        %v939 = vpop.f32.mrf.mxu0
        %940 = vmatprep.mubr.f32.mxu0 0.0
        %941 = vmatmul.mubr.f32.gmra.mxu0 %v402
        %v942 = vpop.f32.mrf.mxu0
        %v943 = vadd.f32 0.0, %v942
        %v944 = vpop.f32.mrf.mxu0
        %945 = vmatprep.mubr.f32.mxu0 0.0
        %946 = vmatmul.mubr.f32.gmra.mxu0 %v405
        %v947 = vpop.f32.mrf.mxu0
        %v948 = vadd.f32 0.0, %v947
        %v949 = vpop.f32.mrf.mxu0
        %950 = vmatprep.mubr.f32.mxu0 0.0
        %951 = vmatmul.mubr.f32.gmra.mxu0 %v408
        %v952 = vpop.f32.mrf.mxu0
        %v953 = vadd.f32 0.0, %v952
        %v954 = vpop.f32.mrf.mxu0
        %955 = vmatprep.mubr.f32.mxu0 0.0
        %956 = vmatmul.mubr.f32.gmra.mxu0 %v411
        %v957 = vpop.f32.mrf.mxu0
        %v958 = vadd.f32 0.0, %v957
        %v959 = vpop.f32.mrf.mxu0
        %960 = vmatprep.mubr.f32.mxu0 0.0
        %961 = vmatmul.mubr.f32.gmra.mxu0 %v856
        %v962 = vpop.f32.mrf.mxu0
        %v963 = vadd.f32 0.0, %v962
        %v964 = vpop.f32.mrf.mxu0
        %965 = vdwg.mxu0
        %v966 = vadd.f32 %v846, %v928
        %v967 = vadd.f32 %v847, %v933
        %v968 = vadd.f32 %v848, %v938
        %v969 = vadd.f32 %v849, %v943
        %v970 = vadd.f32 %v850, %v948
        %v971 = vadd.f32 %v851, %v953
        %v972 = vadd.f32 %v852, %v958
        %v973 = vadd.f32 %v853, %v963
        %v975 = vrot.slane %v375, 1
        %v976 = vrot.slane %v376, 1
        %v977 = vsel %vm538, %v975, %v976
        %v978 = vld [vmem:[%s345 + $0x10] sm:$0xf]
        %v979 = vsel %vm388, %v977, 0
        %v982 = vsel %vm413, %v978, 0
        %984 = vmatprep.subr.mxu0 0.0
        %985 = vmatpush1.msra.mxu0 0.0
        %986 = vmatprep.subr.mxu0 0.0
        %987 = vmatpush1.msra.mxu0 0.0
        %988 = vmatprep.subr.mxu0 0.0
        %989 = vmatpush1.msra.mxu0 0.0
        %990 = vmatprep.subr.mxu0 0.0
        %991 = vmatpush1.msra.mxu0 0.0
        %992 = vmatprep.subr.mxu0 0.0
        %993 = vmatpush1.msra.mxu0 0.0
        %994 = vmatprep.subr.mxu0 0.0
        %995 = vmatpush1.msra.mxu0 0.0
        %996 = vmatprep.subr.mxu0 0.0
        %997 = vmatpush1.msra.mxu0 0.0
        %998 = vmatprep.subr.mxu0 0.0
        %999 = vmatpush1.msra.mxu0 0.0
        %1000 = vmatprep.subr.mxu0 0.0
        %1001 = vmatpush1.msra.mxu0 0.0
        %1002 = vmatprep.subr.mxu0 0.0
        %1003 = vmatpush1.msra.mxu0 0.0
        %1004 = vmatprep.subr.mxu0 0.0
        %1005 = vmatpush1.msra.mxu0 0.0
        %1006 = vmatprep.subr.mxu0 0.0
        %1007 = vmatpush1.msra.mxu0 0.0
        %1008 = vmatprep.subr.mxu0 0.0
        %1009 = vmatpush1.msra.mxu0 0.0
        %1010 = vmatprep.subr.mxu0 0.0
        %1011 = vmatpush1.msra.mxu0 0.0
        %1012 = vmatprep.subr.mxu0 0.0
        %1013 = vmatpush1.msra.mxu0 0.0
        %1014 = vmatprep.subr.mxu0 0.0
        %1015 = vmatpush1.msra.mxu0 %v982
        %1016 = vmatprep.subr.mxu0 0.0
        %1017 = vmatpush2.msra.mxu0 0.0
        %1018 = vmatprep.subr.mxu0 0.0
        %1019 = vmatpush2.msra.mxu0 0.0
        %1020 = vmatprep.subr.mxu0 0.0
        %1021 = vmatpush2.msra.mxu0 0.0
        %1022 = vmatprep.subr.mxu0 0.0
        %1023 = vmatpush2.msra.mxu0 0.0
        %1024 = vmatprep.subr.mxu0 0.0
        %1025 = vmatpush2.msra.mxu0 0.0
        %1026 = vmatprep.subr.mxu0 0.0
        %1027 = vmatpush2.msra.mxu0 0.0
        %1028 = vmatprep.subr.mxu0 0.0
        %1029 = vmatpush2.msra.mxu0 0.0
        %1030 = vmatprep.subr.mxu0 0.0
        %1031 = vmatpush2.msra.mxu0 0.0
        %1032 = vmatprep.subr.mxu0 0.0
        %1033 = vmatpush2.msra.mxu0 0.0
        %1034 = vmatprep.subr.mxu0 0.0
        %1035 = vmatpush2.msra.mxu0 0.0
        %1036 = vmatprep.subr.mxu0 0.0
        %1037 = vmatpush2.msra.mxu0 0.0
        %1038 = vmatprep.subr.mxu0 0.0
        %1039 = vmatpush2.msra.mxu0 0.0
        %1040 = vmatprep.subr.mxu0 0.0
        %1041 = vmatpush2.msra.mxu0 0.0
        %1042 = vmatprep.subr.mxu0 0.0
        %1043 = vmatpush2.msra.mxu0 0.0
        %1044 = vmatprep.subr.mxu0 0.0
        %1045 = vmatpush2.msra.mxu0 0.0
        %1046 = vmatprep.subr.mxu0 0.0
        %1047 = vmatpush2.msra.mxu0 0.0
        %1048 = vmatprep.mubr.f32.mxu0 0.0
        %1049 = vmatmul.mubr.f32.gmra.mxu0 %v566
        %v1050 = vpop.f32.mrf.mxu0
        %v1051 = vadd.f32 0.0, %v1050
        %v1052 = vpop.f32.mrf.mxu0
        %1053 = vmatprep.mubr.f32.mxu0 0.0
        %1054 = vmatmul.mubr.f32.gmra.mxu0 %v568
        %v1055 = vpop.f32.mrf.mxu0
        %v1056 = vadd.f32 0.0, %v1055
        %v1057 = vpop.f32.mrf.mxu0
        %1058 = vmatprep.mubr.f32.mxu0 0.0
        %1059 = vmatmul.mubr.f32.gmra.mxu0 %v570
        %v1060 = vpop.f32.mrf.mxu0
        %v1061 = vadd.f32 0.0, %v1060
        %v1062 = vpop.f32.mrf.mxu0
        %1063 = vmatprep.mubr.f32.mxu0 0.0
        %1064 = vmatmul.mubr.f32.gmra.mxu0 %v572
        %v1065 = vpop.f32.mrf.mxu0
        %v1066 = vadd.f32 0.0, %v1065
        %v1067 = vpop.f32.mrf.mxu0
        %1068 = vmatprep.mubr.f32.mxu0 0.0
        %1069 = vmatmul.mubr.f32.gmra.mxu0 %v574
        %v1070 = vpop.f32.mrf.mxu0
        %v1071 = vadd.f32 0.0, %v1070
        %v1072 = vpop.f32.mrf.mxu0
        %1073 = vmatprep.mubr.f32.mxu0 0.0
        %1074 = vmatmul.mubr.f32.gmra.mxu0 %v576
        %v1075 = vpop.f32.mrf.mxu0
        %v1076 = vadd.f32 0.0, %v1075
        %v1077 = vpop.f32.mrf.mxu0
        %1078 = vmatprep.mubr.f32.mxu0 0.0
        %1079 = vmatmul.mubr.f32.gmra.mxu0 %v578
        %v1080 = vpop.f32.mrf.mxu0
        %v1081 = vadd.f32 0.0, %v1080
        %v1082 = vpop.f32.mrf.mxu0
        %1083 = vmatprep.mubr.f32.mxu0 0.0
        %1084 = vmatmul.mubr.f32.gmra.mxu0 %v979
        %v1085 = vpop.f32.mrf.mxu0
        %v1086 = vadd.f32 0.0, %v1085
        %v1087 = vpop.f32.mrf.mxu0
        %1088 = vdwg.mxu0
        %v1089 = vadd.f32 %v966, %v1051
        %v1090 = vadd.f32 %v967, %v1056
        %v1091 = vadd.f32 %v968, %v1061
        %v1092 = vadd.f32 %v969, %v1066
        %v1093 = vadd.f32 %v970, %v1071
        %v1094 = vadd.f32 %v971, %v1076
        %v1095 = vadd.f32 %v972, %v1081
        %v1096 = vadd.f32 %v973, %v1086
        %v1097 = vrot.slane %v375, 2
        %v1098 = vrot.slane %v376, 2
        %v1099 = vsel %vm696, %v1097, %v1098
        %v1100 = vld [vmem:[%s345 + $0x14] sm:$0xf]
        %v1101 = vsel %vm388, %v1099, 0
        %v1104 = vsel %vm413, %v1100, 0
        %1106 = vmatprep.subr.mxu0 0.0
        %1107 = vmatpush1.msra.mxu0 0.0
        %1108 = vmatprep.subr.mxu0 0.0
        %1109 = vmatpush1.msra.mxu0 0.0
        %1110 = vmatprep.subr.mxu0 0.0
        %1111 = vmatpush1.msra.mxu0 0.0
        %1112 = vmatprep.subr.mxu0 0.0
        %1113 = vmatpush1.msra.mxu0 0.0
        %1114 = vmatprep.subr.mxu0 0.0
        %1115 = vmatpush1.msra.mxu0 0.0
        %1116 = vmatprep.subr.mxu0 0.0
        %1117 = vmatpush1.msra.mxu0 0.0
        %1118 = vmatprep.subr.mxu0 0.0
        %1119 = vmatpush1.msra.mxu0 0.0
        %1120 = vmatprep.subr.mxu0 0.0
        %1121 = vmatpush1.msra.mxu0 0.0
        %1122 = vmatprep.subr.mxu0 0.0
        %1123 = vmatpush1.msra.mxu0 0.0
        %1124 = vmatprep.subr.mxu0 0.0
        %1125 = vmatpush1.msra.mxu0 0.0
        %1126 = vmatprep.subr.mxu0 0.0
        %1127 = vmatpush1.msra.mxu0 0.0
        %1128 = vmatprep.subr.mxu0 0.0
        %1129 = vmatpush1.msra.mxu0 0.0
        %1130 = vmatprep.subr.mxu0 0.0
        %1131 = vmatpush1.msra.mxu0 0.0
        %1132 = vmatprep.subr.mxu0 0.0
        %1133 = vmatpush1.msra.mxu0 0.0
        %1134 = vmatprep.subr.mxu0 0.0
        %1135 = vmatpush1.msra.mxu0 0.0
        %1136 = vmatprep.subr.mxu0 0.0
        %1137 = vmatpush1.msra.mxu0 %v1104
        %1138 = vmatprep.subr.mxu0 0.0
        %1139 = vmatpush2.msra.mxu0 0.0
        %1140 = vmatprep.subr.mxu0 0.0
        %1141 = vmatpush2.msra.mxu0 0.0
        %1142 = vmatprep.subr.mxu0 0.0
        %1143 = vmatpush2.msra.mxu0 0.0
        %1144 = vmatprep.subr.mxu0 0.0
        %1145 = vmatpush2.msra.mxu0 0.0
        %1146 = vmatprep.subr.mxu0 0.0
        %1147 = vmatpush2.msra.mxu0 0.0
        %1148 = vmatprep.subr.mxu0 0.0
        %1149 = vmatpush2.msra.mxu0 0.0
        %1150 = vmatprep.subr.mxu0 0.0
        %1151 = vmatpush2.msra.mxu0 0.0
        %1152 = vmatprep.subr.mxu0 0.0
        %1153 = vmatpush2.msra.mxu0 0.0
        %1154 = vmatprep.subr.mxu0 0.0
        %1155 = vmatpush2.msra.mxu0 0.0
        %1156 = vmatprep.subr.mxu0 0.0
        %1157 = vmatpush2.msra.mxu0 0.0
        %1158 = vmatprep.subr.mxu0 0.0
        %1159 = vmatpush2.msra.mxu0 0.0
        %1160 = vmatprep.subr.mxu0 0.0
        %1161 = vmatpush2.msra.mxu0 0.0
        %1162 = vmatprep.subr.mxu0 0.0
        %1163 = vmatpush2.msra.mxu0 0.0
        %1164 = vmatprep.subr.mxu0 0.0
        %1165 = vmatpush2.msra.mxu0 0.0
        %1166 = vmatprep.subr.mxu0 0.0
        %1167 = vmatpush2.msra.mxu0 0.0
        %1168 = vmatprep.subr.mxu0 0.0
        %1169 = vmatpush2.msra.mxu0 0.0
        %1170 = vmatprep.mubr.f32.mxu0 0.0
        %1171 = vmatmul.mubr.f32.gmra.mxu0 %v724
        %v1172 = vpop.f32.mrf.mxu0
        %v1173 = vadd.f32 0.0, %v1172
        %v1174 = vpop.f32.mrf.mxu0
        %1175 = vmatprep.mubr.f32.mxu0 0.0
        %1176 = vmatmul.mubr.f32.gmra.mxu0 %v726
        %v1177 = vpop.f32.mrf.mxu0
        %v1178 = vadd.f32 0.0, %v1177
        %v1179 = vpop.f32.mrf.mxu0
        %1180 = vmatprep.mubr.f32.mxu0 0.0
        %1181 = vmatmul.mubr.f32.gmra.mxu0 %v728
        %v1182 = vpop.f32.mrf.mxu0
        %v1183 = vadd.f32 0.0, %v1182
        %v1184 = vpop.f32.mrf.mxu0
        %1185 = vmatprep.mubr.f32.mxu0 0.0
        %1186 = vmatmul.mubr.f32.gmra.mxu0 %v730
        %v1187 = vpop.f32.mrf.mxu0
        %v1188 = vadd.f32 0.0, %v1187
        %v1189 = vpop.f32.mrf.mxu0
        %1190 = vmatprep.mubr.f32.mxu0 0.0
        %1191 = vmatmul.mubr.f32.gmra.mxu0 %v732
        %v1192 = vpop.f32.mrf.mxu0
        %v1193 = vadd.f32 0.0, %v1192
        %v1194 = vpop.f32.mrf.mxu0
        %1195 = vmatprep.mubr.f32.mxu0 0.0
        %1196 = vmatmul.mubr.f32.gmra.mxu0 %v734
        %v1197 = vpop.f32.mrf.mxu0
        %v1198 = vadd.f32 0.0, %v1197
        %v1199 = vpop.f32.mrf.mxu0
        %1200 = vmatprep.mubr.f32.mxu0 0.0
        %1201 = vmatmul.mubr.f32.gmra.mxu0 %v736
        %v1202 = vpop.f32.mrf.mxu0
        %v1203 = vadd.f32 0.0, %v1202
        %v1204 = vpop.f32.mrf.mxu0
        %1205 = vmatprep.mubr.f32.mxu0 0.0
        %1206 = vmatmul.mubr.f32.gmra.mxu0 %v1101
        %v1207 = vpop.f32.mrf.mxu0
        %v1208 = vadd.f32 0.0, %v1207
        %v1209 = vpop.f32.mrf.mxu0
        %1210 = vdwg.mxu0
        %v1211 = vadd.f32 %v1089, %v1173
        %v1212 = vadd.f32 %v1090, %v1178
        %v1213 = vadd.f32 %v1091, %v1183
        %v1214 = vadd.f32 %v1092, %v1188
        %v1215 = vadd.f32 %v1093, %v1193
        %v1216 = vadd.f32 %v1094, %v1198
        %v1217 = vadd.f32 %v1095, %v1203
        %v1218 = vadd.f32 %v1096, %v1208
        %v1219 = vld [vmem:[%s345 + $0x18] sm:$0xf]
        %v1221 = vsel %vm388, %v377, 0
        %v1224 = vsel %vm413, %v1219, 0
        %1226 = vmatprep.subr.mxu0 0.0
        %1227 = vmatpush1.msra.mxu0 0.0
        %1228 = vmatprep.subr.mxu0 0.0
        %1229 = vmatpush1.msra.mxu0 0.0
        %1230 = vmatprep.subr.mxu0 0.0
        %1231 = vmatpush1.msra.mxu0 0.0
        %1232 = vmatprep.subr.mxu0 0.0
        %1233 = vmatpush1.msra.mxu0 0.0
        %1234 = vmatprep.subr.mxu0 0.0
        %1235 = vmatpush1.msra.mxu0 0.0
        %1236 = vmatprep.subr.mxu0 0.0
        %1237 = vmatpush1.msra.mxu0 0.0
        %1238 = vmatprep.subr.mxu0 0.0
        %1239 = vmatpush1.msra.mxu0 0.0
        %1240 = vmatprep.subr.mxu0 0.0
        %1241 = vmatpush1.msra.mxu0 0.0
        %1242 = vmatprep.subr.mxu0 0.0
        %1243 = vmatpush1.msra.mxu0 0.0
        %1244 = vmatprep.subr.mxu0 0.0
        %1245 = vmatpush1.msra.mxu0 0.0
        %1246 = vmatprep.subr.mxu0 0.0
        %1247 = vmatpush1.msra.mxu0 0.0
        %1248 = vmatprep.subr.mxu0 0.0
        %1249 = vmatpush1.msra.mxu0 0.0
        %1250 = vmatprep.subr.mxu0 0.0
        %1251 = vmatpush1.msra.mxu0 0.0
        %1252 = vmatprep.subr.mxu0 0.0
        %1253 = vmatpush1.msra.mxu0 0.0
        %1254 = vmatprep.subr.mxu0 0.0
        %1255 = vmatpush1.msra.mxu0 0.0
        %1256 = vmatprep.subr.mxu0 0.0
        %1257 = vmatpush1.msra.mxu0 %v1224
        %1258 = vmatprep.subr.mxu0 0.0
        %1259 = vmatpush2.msra.mxu0 0.0
        %1260 = vmatprep.subr.mxu0 0.0
        %1261 = vmatpush2.msra.mxu0 0.0
        %1262 = vmatprep.subr.mxu0 0.0
        %1263 = vmatpush2.msra.mxu0 0.0
        %1264 = vmatprep.subr.mxu0 0.0
        %1265 = vmatpush2.msra.mxu0 0.0
        %1266 = vmatprep.subr.mxu0 0.0
        %1267 = vmatpush2.msra.mxu0 0.0
        %1268 = vmatprep.subr.mxu0 0.0
        %1269 = vmatpush2.msra.mxu0 0.0
        %1270 = vmatprep.subr.mxu0 0.0
        %1271 = vmatpush2.msra.mxu0 0.0
        %1272 = vmatprep.subr.mxu0 0.0
        %1273 = vmatpush2.msra.mxu0 0.0
        %1274 = vmatprep.subr.mxu0 0.0
        %1275 = vmatpush2.msra.mxu0 0.0
        %1276 = vmatprep.subr.mxu0 0.0
        %1277 = vmatpush2.msra.mxu0 0.0
        %1278 = vmatprep.subr.mxu0 0.0
        %1279 = vmatpush2.msra.mxu0 0.0
        %1280 = vmatprep.subr.mxu0 0.0
        %1281 = vmatpush2.msra.mxu0 0.0
        %1282 = vmatprep.subr.mxu0 0.0
        %1283 = vmatpush2.msra.mxu0 0.0
        %1284 = vmatprep.subr.mxu0 0.0
        %1285 = vmatpush2.msra.mxu0 0.0
        %1286 = vmatprep.subr.mxu0 0.0
        %1287 = vmatpush2.msra.mxu0 0.0
        %1288 = vmatprep.subr.mxu0 0.0
        %1289 = vmatpush2.msra.mxu0 0.0
        %1290 = vmatprep.mubr.f32.mxu0 0.0
        %1291 = vmatmul.mubr.f32.gmra.mxu0 %v396
        %v1292 = vpop.f32.mrf.mxu0
        %v1293 = vadd.f32 0.0, %v1292
        %v1294 = vpop.f32.mrf.mxu0
        %1295 = vmatprep.mubr.f32.mxu0 0.0
        %1296 = vmatmul.mubr.f32.gmra.mxu0 %v399
        %v1297 = vpop.f32.mrf.mxu0
        %v1298 = vadd.f32 0.0, %v1297
        %v1299 = vpop.f32.mrf.mxu0
        %1300 = vmatprep.mubr.f32.mxu0 0.0
        %1301 = vmatmul.mubr.f32.gmra.mxu0 %v402
        %v1302 = vpop.f32.mrf.mxu0
        %v1303 = vadd.f32 0.0, %v1302
        %v1304 = vpop.f32.mrf.mxu0
        %1305 = vmatprep.mubr.f32.mxu0 0.0
        %1306 = vmatmul.mubr.f32.gmra.mxu0 %v405
        %v1307 = vpop.f32.mrf.mxu0
        %v1308 = vadd.f32 0.0, %v1307
        %v1309 = vpop.f32.mrf.mxu0
        %1310 = vmatprep.mubr.f32.mxu0 0.0
        %1311 = vmatmul.mubr.f32.gmra.mxu0 %v408
        %v1312 = vpop.f32.mrf.mxu0
        %v1313 = vadd.f32 0.0, %v1312
        %v1314 = vpop.f32.mrf.mxu0
        %1315 = vmatprep.mubr.f32.mxu0 0.0
        %1316 = vmatmul.mubr.f32.gmra.mxu0 %v411
        %v1317 = vpop.f32.mrf.mxu0
        %v1318 = vadd.f32 0.0, %v1317
        %v1319 = vpop.f32.mrf.mxu0
        %1320 = vmatprep.mubr.f32.mxu0 0.0
        %1321 = vmatmul.mubr.f32.gmra.mxu0 %v856
        %v1322 = vpop.f32.mrf.mxu0
        %v1323 = vadd.f32 0.0, %v1322
        %v1324 = vpop.f32.mrf.mxu0
        %1325 = vmatprep.mubr.f32.mxu0 0.0
        %1326 = vmatmul.mubr.f32.gmra.mxu0 %v1221
        %v1327 = vpop.f32.mrf.mxu0
        %v1328 = vadd.f32 0.0, %v1327
        %v1329 = vpop.f32.mrf.mxu0
        %1330 = vdwg.mxu0
        %v1331 = vadd.f32 %v1211, %v1293
        %v1332 = vadd.f32 %v1212, %v1298
        %v1333 = vadd.f32 %v1213, %v1303
        %v1334 = vadd.f32 %v1214, %v1308
        %v1335 = vadd.f32 %v1215, %v1313
        %v1336 = vadd.f32 %v1216, %v1318
        %v1337 = vadd.f32 %v1217, %v1323
        %v1338 = vadd.f32 %v1218, %v1328
        %v1340 = vrot.slane %v377, 1
        %v1341 = vrot.slane %v378, 1
        %v1342 = vsel %vm538, %v1340, %v1341
        %v1343 = vld [vmem:[%s345 + $0x1c] sm:$0xf]
        %v1344 = vsel %vm388, %v1342, 0
        %v1347 = vsel %vm413, %v1343, 0
        %1349 = vmatprep.subr.mxu0 0.0
        %1350 = vmatpush1.msra.mxu0 0.0
        %1351 = vmatprep.subr.mxu0 0.0
        %1352 = vmatpush1.msra.mxu0 0.0
        %1353 = vmatprep.subr.mxu0 0.0
        %1354 = vmatpush1.msra.mxu0 0.0
        %1355 = vmatprep.subr.mxu0 0.0
        %1356 = vmatpush1.msra.mxu0 0.0
        %1357 = vmatprep.subr.mxu0 0.0
        %1358 = vmatpush1.msra.mxu0 0.0
        %1359 = vmatprep.subr.mxu0 0.0
        %1360 = vmatpush1.msra.mxu0 0.0
        %1361 = vmatprep.subr.mxu0 0.0
        %1362 = vmatpush1.msra.mxu0 0.0
        %1363 = vmatprep.subr.mxu0 0.0
        %1364 = vmatpush1.msra.mxu0 0.0
        %1365 = vmatprep.subr.mxu0 0.0
        %1366 = vmatpush1.msra.mxu0 0.0
        %1367 = vmatprep.subr.mxu0 0.0
        %1368 = vmatpush1.msra.mxu0 0.0
        %1369 = vmatprep.subr.mxu0 0.0
        %1370 = vmatpush1.msra.mxu0 0.0
        %1371 = vmatprep.subr.mxu0 0.0
        %1372 = vmatpush1.msra.mxu0 0.0
        %1373 = vmatprep.subr.mxu0 0.0
        %1374 = vmatpush1.msra.mxu0 0.0
        %1375 = vmatprep.subr.mxu0 0.0
        %1376 = vmatpush1.msra.mxu0 0.0
        %1377 = vmatprep.subr.mxu0 0.0
        %1378 = vmatpush1.msra.mxu0 0.0
        %1379 = vmatprep.subr.mxu0 0.0
        %1380 = vmatpush1.msra.mxu0 %v1347
        %1381 = vmatprep.subr.mxu0 0.0
        %1382 = vmatpush2.msra.mxu0 0.0
        %1383 = vmatprep.subr.mxu0 0.0
        %1384 = vmatpush2.msra.mxu0 0.0
        %1385 = vmatprep.subr.mxu0 0.0
        %1386 = vmatpush2.msra.mxu0 0.0
        %1387 = vmatprep.subr.mxu0 0.0
        %1388 = vmatpush2.msra.mxu0 0.0
        %1389 = vmatprep.subr.mxu0 0.0
        %1390 = vmatpush2.msra.mxu0 0.0
        %1391 = vmatprep.subr.mxu0 0.0
        %1392 = vmatpush2.msra.mxu0 0.0
        %1393 = vmatprep.subr.mxu0 0.0
        %1394 = vmatpush2.msra.mxu0 0.0
        %1395 = vmatprep.subr.mxu0 0.0
        %1396 = vmatpush2.msra.mxu0 0.0
        %1397 = vmatprep.subr.mxu0 0.0
        %1398 = vmatpush2.msra.mxu0 0.0
        %1399 = vmatprep.subr.mxu0 0.0
        %1400 = vmatpush2.msra.mxu0 0.0
        %1401 = vmatprep.subr.mxu0 0.0
        %1402 = vmatpush2.msra.mxu0 0.0
        %1403 = vmatprep.subr.mxu0 0.0
        %1404 = vmatpush2.msra.mxu0 0.0
        %1405 = vmatprep.subr.mxu0 0.0
        %1406 = vmatpush2.msra.mxu0 0.0
        %1407 = vmatprep.subr.mxu0 0.0
        %1408 = vmatpush2.msra.mxu0 0.0
        %1409 = vmatprep.subr.mxu0 0.0
        %1410 = vmatpush2.msra.mxu0 0.0
        %1411 = vmatprep.subr.mxu0 0.0
        %1412 = vmatpush2.msra.mxu0 0.0
        %1413 = vmatprep.mubr.f32.mxu0 0.0
        %1414 = vmatmul.mubr.f32.gmra.mxu0 %v568
        %v1415 = vpop.f32.mrf.mxu0
        %v1416 = vadd.f32 0.0, %v1415
        %v1417 = vpop.f32.mrf.mxu0
        %1418 = vmatprep.mubr.f32.mxu0 0.0
        %1419 = vmatmul.mubr.f32.gmra.mxu0 %v570
        %v1420 = vpop.f32.mrf.mxu0
        %v1421 = vadd.f32 0.0, %v1420
        %v1422 = vpop.f32.mrf.mxu0
        %1423 = vmatprep.mubr.f32.mxu0 0.0
        %1424 = vmatmul.mubr.f32.gmra.mxu0 %v572
        %v1425 = vpop.f32.mrf.mxu0
        %v1426 = vadd.f32 0.0, %v1425
        %v1427 = vpop.f32.mrf.mxu0
        %1428 = vmatprep.mubr.f32.mxu0 0.0
        %1429 = vmatmul.mubr.f32.gmra.mxu0 %v574
        %v1430 = vpop.f32.mrf.mxu0
        %v1431 = vadd.f32 0.0, %v1430
        %v1432 = vpop.f32.mrf.mxu0
        %1433 = vmatprep.mubr.f32.mxu0 0.0
        %1434 = vmatmul.mubr.f32.gmra.mxu0 %v576
        %v1435 = vpop.f32.mrf.mxu0
        %v1436 = vadd.f32 0.0, %v1435
        %v1437 = vpop.f32.mrf.mxu0
        %1438 = vmatprep.mubr.f32.mxu0 0.0
        %1439 = vmatmul.mubr.f32.gmra.mxu0 %v578
        %v1440 = vpop.f32.mrf.mxu0
        %v1441 = vadd.f32 0.0, %v1440
        %v1442 = vpop.f32.mrf.mxu0
        %1443 = vmatprep.mubr.f32.mxu0 0.0
        %1444 = vmatmul.mubr.f32.gmra.mxu0 %v979
        %v1445 = vpop.f32.mrf.mxu0
        %v1446 = vadd.f32 0.0, %v1445
        %v1447 = vpop.f32.mrf.mxu0
        %1448 = vmatprep.mubr.f32.mxu0 0.0
        %1449 = vmatmul.mubr.f32.gmra.mxu0 %v1344
        %v1450 = vpop.f32.mrf.mxu0
        %v1451 = vadd.f32 0.0, %v1450
        %v1452 = vpop.f32.mrf.mxu0
        %1453 = vdwg.mxu0
        %v1454 = vadd.f32 %v1331, %v1416
        %v1455 = vadd.f32 %v1332, %v1421
        %v1456 = vadd.f32 %v1333, %v1426
        %v1457 = vadd.f32 %v1334, %v1431
        %v1458 = vadd.f32 %v1335, %v1436
        %v1459 = vadd.f32 %v1336, %v1441
        %v1460 = vadd.f32 %v1337, %v1446
        %v1461 = vadd.f32 %v1338, %v1451
        %v1462 = vrot.slane %v377, 2
        %v1463 = vrot.slane %v378, 2
        %v1464 = vsel %vm696, %v1462, %v1463
        %v1465 = vld [vmem:[%s345 + $0x20] sm:$0xf]
        %v1466 = vsel %vm388, %v1464, 0
        %v1469 = vsel %vm413, %v1465, 0
        %1471 = vmatprep.subr.mxu0 0.0
        %1472 = vmatpush1.msra.mxu0 0.0
        %1473 = vmatprep.subr.mxu0 0.0
        %1474 = vmatpush1.msra.mxu0 0.0
        %1475 = vmatprep.subr.mxu0 0.0
        %1476 = vmatpush1.msra.mxu0 0.0
        %1477 = vmatprep.subr.mxu0 0.0
        %1478 = vmatpush1.msra.mxu0 0.0
        %1479 = vmatprep.subr.mxu0 0.0
        %1480 = vmatpush1.msra.mxu0 0.0
        %1481 = vmatprep.subr.mxu0 0.0
        %1482 = vmatpush1.msra.mxu0 0.0
        %1483 = vmatprep.subr.mxu0 0.0
        %1484 = vmatpush1.msra.mxu0 0.0
        %1485 = vmatprep.subr.mxu0 0.0
        %1486 = vmatpush1.msra.mxu0 0.0
        %1487 = vmatprep.subr.mxu0 0.0
        %1488 = vmatpush1.msra.mxu0 0.0
        %1489 = vmatprep.subr.mxu0 0.0
        %1490 = vmatpush1.msra.mxu0 0.0
        %1491 = vmatprep.subr.mxu0 0.0
        %1492 = vmatpush1.msra.mxu0 0.0
        %1493 = vmatprep.subr.mxu0 0.0
        %1494 = vmatpush1.msra.mxu0 0.0
        %1495 = vmatprep.subr.mxu0 0.0
        %1496 = vmatpush1.msra.mxu0 0.0
        %1497 = vmatprep.subr.mxu0 0.0
        %1498 = vmatpush1.msra.mxu0 0.0
        %1499 = vmatprep.subr.mxu0 0.0
        %1500 = vmatpush1.msra.mxu0 0.0
        %1501 = vmatprep.subr.mxu0 0.0
        %1502 = vmatpush1.msra.mxu0 %v1469
        %1503 = vmatprep.subr.mxu0 0.0
        %1504 = vmatpush2.msra.mxu0 0.0
        %1505 = vmatprep.subr.mxu0 0.0
        %1506 = vmatpush2.msra.mxu0 0.0
        %1507 = vmatprep.subr.mxu0 0.0
        %1508 = vmatpush2.msra.mxu0 0.0
        %1509 = vmatprep.subr.mxu0 0.0
        %1510 = vmatpush2.msra.mxu0 0.0
        %1511 = vmatprep.subr.mxu0 0.0
        %1512 = vmatpush2.msra.mxu0 0.0
        %1513 = vmatprep.subr.mxu0 0.0
        %1514 = vmatpush2.msra.mxu0 0.0
        %1515 = vmatprep.subr.mxu0 0.0
        %1516 = vmatpush2.msra.mxu0 0.0
        %1517 = vmatprep.subr.mxu0 0.0
        %1518 = vmatpush2.msra.mxu0 0.0
        %1519 = vmatprep.subr.mxu0 0.0
        %1520 = vmatpush2.msra.mxu0 0.0
        %1521 = vmatprep.subr.mxu0 0.0
        %1522 = vmatpush2.msra.mxu0 0.0
        %1523 = vmatprep.subr.mxu0 0.0
        %1524 = vmatpush2.msra.mxu0 0.0
        %1525 = vmatprep.subr.mxu0 0.0
        %1526 = vmatpush2.msra.mxu0 0.0
        %1527 = vmatprep.subr.mxu0 0.0
        %1528 = vmatpush2.msra.mxu0 0.0
        %1529 = vmatprep.subr.mxu0 0.0
        %1530 = vmatpush2.msra.mxu0 0.0
        %1531 = vmatprep.subr.mxu0 0.0
        %1532 = vmatpush2.msra.mxu0 0.0
        %1533 = vmatprep.subr.mxu0 0.0
        %1534 = vmatpush2.msra.mxu0 0.0
        %1535 = vmatprep.mubr.f32.mxu0 0.0
        %1536 = vmatmul.mubr.f32.gmra.mxu0 %v726
        %v1537 = vpop.f32.mrf.mxu0
        %v1538 = vadd.f32 0.0, %v1537
        %v1539 = vpop.f32.mrf.mxu0
        %1540 = vmatprep.mubr.f32.mxu0 0.0
        %1541 = vmatmul.mubr.f32.gmra.mxu0 %v728
        %v1542 = vpop.f32.mrf.mxu0
        %v1543 = vadd.f32 0.0, %v1542
        %v1544 = vpop.f32.mrf.mxu0
        %1545 = vmatprep.mubr.f32.mxu0 0.0
        %1546 = vmatmul.mubr.f32.gmra.mxu0 %v730
        %v1547 = vpop.f32.mrf.mxu0
        %v1548 = vadd.f32 0.0, %v1547
        %v1549 = vpop.f32.mrf.mxu0
        %1550 = vmatprep.mubr.f32.mxu0 0.0
        %1551 = vmatmul.mubr.f32.gmra.mxu0 %v732
        %v1552 = vpop.f32.mrf.mxu0
        %v1553 = vadd.f32 0.0, %v1552
        %v1554 = vpop.f32.mrf.mxu0
        %1555 = vmatprep.mubr.f32.mxu0 0.0
        %1556 = vmatmul.mubr.f32.gmra.mxu0 %v734
        %v1557 = vpop.f32.mrf.mxu0
        %v1558 = vadd.f32 0.0, %v1557
        %v1559 = vpop.f32.mrf.mxu0
        %1560 = vmatprep.mubr.f32.mxu0 0.0
        %1561 = vmatmul.mubr.f32.gmra.mxu0 %v736
        %v1562 = vpop.f32.mrf.mxu0
        %v1563 = vadd.f32 0.0, %v1562
        %v1564 = vpop.f32.mrf.mxu0
        %1565 = vmatprep.mubr.f32.mxu0 0.0
        %1566 = vmatmul.mubr.f32.gmra.mxu0 %v1101
        %v1567 = vpop.f32.mrf.mxu0
        %v1568 = vadd.f32 0.0, %v1567
        %v1569 = vpop.f32.mrf.mxu0
        %1570 = vmatprep.mubr.f32.mxu0 0.0
        %1571 = vmatmul.mubr.f32.gmra.mxu0 %v1466
        %v1572 = vpop.f32.mrf.mxu0
        %v1573 = vadd.f32 0.0, %v1572
        %v1574 = vpop.f32.mrf.mxu0
        %1575 = vdwg.mxu0
        %v1576 = vadd.f32 %v1454, %v1538
        %v1577 = vadd.f32 %v1455, %v1543
        %v1578 = vadd.f32 %v1456, %v1548
        %v1579 = vadd.f32 %v1457, %v1553
        %v1580 = vadd.f32 %v1458, %v1558
        %v1581 = vadd.f32 %v1459, %v1563
        %v1582 = vadd.f32 %v1460, %v1568
        %v1583 = vadd.f32 %v1461, %v1573
        %1584 = vst.msk [vmem:[#allocation2] sm:$0xff] %vm388, %v1576
        %1585 = vst.msk [vmem:[#allocation2 + $0x8] sm:$0xff] %vm388, %v1577
        %1586 = vst.msk [vmem:[#allocation2 + $0x10] sm:$0xff] %vm388, %v1578
        %1587 = vst.msk [vmem:[#allocation2 + $0x18] sm:$0xff] %vm388, %v1579
        %1588 = vst.msk [vmem:[#allocation2 + $0x20] sm:$0xff] %vm388, %v1580
        %1589 = vst.msk [vmem:[#allocation2 + $0x28] sm:$0xff] %vm388, %v1581
        %1590 = vst.msk [vmem:[#allocation2 + $0x30] sm:$0xff] %vm388, %v1582
        %1591 = vst.msk [vmem:[#allocation2 + $0x38] sm:$0xff] %vm388, %v1583
        %p1592 = scmp.eq.s32.totalorder %s27, 2
        // Predicated region
        $region49: #{bottleneck_forward.3} parent=43 // pred_check
          %p1593 = pneg %p1592
        $region50: #{bottleneck_forward.3} parent=43 // pred_check_branch
          %1595 = sbr.rel (%p1593) target = $region52
        $region51: #{bottleneck_forward.3} parent=43 // pred_region
          %v1596 = vld [vmem:[#allocation2] sm:$0xff]
          %v1597 = vld [vmem:[#allocation2 + $0x8] sm:$0xff]
          %v1598 = vld [vmem:[#allocation2 + $0x10] sm:$0xff]
          %v1599 = vld [vmem:[#allocation2 + $0x18] sm:$0xff]
          %v1600 = vld [vmem:[#allocation2 + $0x20] sm:$0xff]
          %v1601 = vld [vmem:[#allocation2 + $0x28] sm:$0xff]
          %v1602 = vld [vmem:[#allocation2 + $0x30] sm:$0xff]
          %v1603 = vld [vmem:[#allocation2 + $0x38] sm:$0xff]
          %v1604 = vld [vmem:[%s3] sm:$0x1]
          %v1606 = vlaneseq
          %v1607 = vshrl.u32 %v1606, 7
          %v1608 = vsub.s32 0, %v1607
          %v1609 = vrot.slane %v1604, %v1608
          %v1611 = vadd.f32 %v1596, %v1609
          %v1612 = vadd.f32 %v1597, %v1609
          %v1613 = vadd.f32 %v1598, %v1609
          %v1614 = vadd.f32 %v1599, %v1609
          %v1615 = vadd.f32 %v1600, %v1609
          %v1616 = vadd.f32 %v1601, %v1609
          %v1617 = vadd.f32 %v1602, %v1609
          %v1618 = vadd.f32 %v1603, %v1609
          %v1619 = vmax.f32 %v1611, 0.0
          %v1620 = vmax.f32 %v1612, 0.0
          %v1621 = vmax.f32 %v1613, 0.0
          %v1622 = vmax.f32 %v1614, 0.0
          %v1623 = vmax.f32 %v1615, 0.0
          %v1624 = vmax.f32 %v1616, 0.0
          %v1625 = vmax.f32 %v1617, 0.0
          %v1626 = vmax.f32 %v1618, 0.0
          %v1627 = vld [vmem:[%s4] sm:$0xf]
          %v1628 = vld [vmem:[%s5] sm:$0x1]
          %v1630 = vlaneseq
          %v1631 = vshrl.u32 %v1630, 7
          %v1632 = vsub.s32 0, %v1631
          %v1633 = vrot.slane %v1628, %v1632
          %v1636 = vsel %vm388, %v1619, 0
          %v1639 = vsel %vm388, %v1620, 0
          %v1642 = vsel %vm388, %v1621, 0
          %v1645 = vsel %vm388, %v1622, 0
          %v1648 = vsel %vm388, %v1623, 0
          %v1651 = vsel %vm388, %v1624, 0
          %v1654 = vsel %vm388, %v1625, 0
          %v1657 = vsel %vm388, %v1626, 0
          %v1660 = vsel %vm413, %v1627, 0
          %1662 = vmatprep.subr.mxu0 0.0
          %1663 = vmatpush1.msra.mxu0 0.0
          %1664 = vmatprep.subr.mxu0 0.0
          %1665 = vmatpush1.msra.mxu0 0.0
          %1666 = vmatprep.subr.mxu0 0.0
          %1667 = vmatpush1.msra.mxu0 0.0
          %1668 = vmatprep.subr.mxu0 0.0
          %1669 = vmatpush1.msra.mxu0 0.0
          %1670 = vmatprep.subr.mxu0 0.0
          %1671 = vmatpush1.msra.mxu0 0.0
          %1672 = vmatprep.subr.mxu0 0.0
          %1673 = vmatpush1.msra.mxu0 0.0
          %1674 = vmatprep.subr.mxu0 0.0
          %1675 = vmatpush1.msra.mxu0 0.0
          %1676 = vmatprep.subr.mxu0 0.0
          %1677 = vmatpush1.msra.mxu0 0.0
          %1678 = vmatprep.subr.mxu0 0.0
          %1679 = vmatpush1.msra.mxu0 0.0
          %1680 = vmatprep.subr.mxu0 0.0
          %1681 = vmatpush1.msra.mxu0 0.0
          %1682 = vmatprep.subr.mxu0 0.0
          %1683 = vmatpush1.msra.mxu0 0.0
          %1684 = vmatprep.subr.mxu0 0.0
          %1685 = vmatpush1.msra.mxu0 0.0
          %1686 = vmatprep.subr.mxu0 0.0
          %1687 = vmatpush1.msra.mxu0 0.0
          %1688 = vmatprep.subr.mxu0 0.0
          %1689 = vmatpush1.msra.mxu0 0.0
          %1690 = vmatprep.subr.mxu0 0.0
          %1691 = vmatpush1.msra.mxu0 0.0
          %1692 = vmatprep.subr.mxu0 0.0
          %1693 = vmatpush1.msra.mxu0 %v1660
          %1694 = vmatprep.subr.mxu0 0.0
          %1695 = vmatpush2.msra.mxu0 0.0
          %1696 = vmatprep.subr.mxu0 0.0
          %1697 = vmatpush2.msra.mxu0 0.0
          %1698 = vmatprep.subr.mxu0 0.0
          %1699 = vmatpush2.msra.mxu0 0.0
          %1700 = vmatprep.subr.mxu0 0.0
          %1701 = vmatpush2.msra.mxu0 0.0
          %1702 = vmatprep.subr.mxu0 0.0
          %1703 = vmatpush2.msra.mxu0 0.0
          %1704 = vmatprep.subr.mxu0 0.0
          %1705 = vmatpush2.msra.mxu0 0.0
          %1706 = vmatprep.subr.mxu0 0.0
          %1707 = vmatpush2.msra.mxu0 0.0
          %1708 = vmatprep.subr.mxu0 0.0
          %1709 = vmatpush2.msra.mxu0 0.0
          %1710 = vmatprep.subr.mxu0 0.0
          %1711 = vmatpush2.msra.mxu0 0.0
          %1712 = vmatprep.subr.mxu0 0.0
          %1713 = vmatpush2.msra.mxu0 0.0
          %1714 = vmatprep.subr.mxu0 0.0
          %1715 = vmatpush2.msra.mxu0 0.0
          %1716 = vmatprep.subr.mxu0 0.0
          %1717 = vmatpush2.msra.mxu0 0.0
          %1718 = vmatprep.subr.mxu0 0.0
          %1719 = vmatpush2.msra.mxu0 0.0
          %1720 = vmatprep.subr.mxu0 0.0
          %1721 = vmatpush2.msra.mxu0 0.0
          %1722 = vmatprep.subr.mxu0 0.0
          %1723 = vmatpush2.msra.mxu0 0.0
          %1724 = vmatprep.subr.mxu0 0.0
          %1725 = vmatpush2.msra.mxu0 0.0
          %1726 = vmatprep.mubr.f32.mxu0 0.0
          %1727 = vmatmul.mubr.f32.gmra.mxu0 %v1636
          %v1728 = vpop.f32.mrf.mxu0
          %v1729 = vadd.f32 %v1633, %v1728
          %v1730 = vpop.f32.mrf.mxu0
          %1731 = vmatprep.mubr.f32.mxu0 0.0
          %1732 = vmatmul.mubr.f32.gmra.mxu0 %v1639
          %v1733 = vpop.f32.mrf.mxu0
          %v1734 = vadd.f32 %v1633, %v1733
          %v1735 = vpop.f32.mrf.mxu0
          %1736 = vmatprep.mubr.f32.mxu0 0.0
          %1737 = vmatmul.mubr.f32.gmra.mxu0 %v1642
          %v1738 = vpop.f32.mrf.mxu0
          %v1739 = vadd.f32 %v1633, %v1738
          %v1740 = vpop.f32.mrf.mxu0
          %1741 = vmatprep.mubr.f32.mxu0 0.0
          %1742 = vmatmul.mubr.f32.gmra.mxu0 %v1645
          %v1743 = vpop.f32.mrf.mxu0
          %v1744 = vadd.f32 %v1633, %v1743
          %v1745 = vpop.f32.mrf.mxu0
          %1746 = vmatprep.mubr.f32.mxu0 0.0
          %1747 = vmatmul.mubr.f32.gmra.mxu0 %v1648
          %v1748 = vpop.f32.mrf.mxu0
          %v1749 = vadd.f32 %v1633, %v1748
          %v1750 = vpop.f32.mrf.mxu0
          %1751 = vmatprep.mubr.f32.mxu0 0.0
          %1752 = vmatmul.mubr.f32.gmra.mxu0 %v1651
          %v1753 = vpop.f32.mrf.mxu0
          %v1754 = vadd.f32 %v1633, %v1753
          %v1755 = vpop.f32.mrf.mxu0
          %1756 = vmatprep.mubr.f32.mxu0 0.0
          %1757 = vmatmul.mubr.f32.gmra.mxu0 %v1654
          %v1758 = vpop.f32.mrf.mxu0
          %v1759 = vadd.f32 %v1633, %v1758
          %v1760 = vpop.f32.mrf.mxu0
          %1761 = vmatprep.mubr.f32.mxu0 0.0
          %1762 = vmatmul.mubr.f32.gmra.mxu0 %v1657
          %v1763 = vpop.f32.mrf.mxu0
          %v1764 = vadd.f32 %v1633, %v1763
          %v1765 = vpop.f32.mrf.mxu0
          %1766 = vdwg.mxu0
          %v1767 = vld [vmem:[%s340] sm:$0xff]
          %v1768 = vld [vmem:[%s340 + $0x8] sm:$0xff]
          %v1769 = vld [vmem:[%s340 + $0x10] sm:$0xff]
          %v1770 = vld [vmem:[%s340 + $0x18] sm:$0xff]
          %v1771 = vld [vmem:[%s340 + $0x20] sm:$0xff]
          %v1772 = vld [vmem:[%s340 + $0x28] sm:$0xff]
          %v1773 = vld [vmem:[%s340 + $0x30] sm:$0xff]
          %v1774 = vld [vmem:[%s340 + $0x38] sm:$0xff]
          %v1775 = vadd.f32 %v1729, %v1767
          %v1776 = vadd.f32 %v1734, %v1768
          %v1777 = vadd.f32 %v1739, %v1769
          %v1778 = vadd.f32 %v1744, %v1770
          %v1779 = vadd.f32 %v1749, %v1771
          %v1780 = vadd.f32 %v1754, %v1772
          %v1781 = vadd.f32 %v1759, %v1773
          %v1782 = vadd.f32 %v1764, %v1774
          %v1783 = vmax.f32 %v1775, 0.0
          %v1784 = vmax.f32 %v1776, 0.0
          %v1785 = vmax.f32 %v1777, 0.0
          %v1786 = vmax.f32 %v1778, 0.0
          %v1787 = vmax.f32 %v1779, 0.0
          %v1788 = vmax.f32 %v1780, 0.0
          %v1789 = vmax.f32 %v1781, 0.0
          %v1790 = vmax.f32 %v1782, 0.0
          %vm1791 = vcmask 130048
          %1792 = vst.msk [vmem:[%s320] sm:$0xff] %vm1791, %v1783
          %1793 = vst.msk [vmem:[%s320 + $0x8] sm:$0xff] %vm1791, %v1784
          %1794 = vst.msk [vmem:[%s320 + $0x10] sm:$0xff] %vm1791, %v1785
          %1795 = vst.msk [vmem:[%s320 + $0x18] sm:$0xff] %vm1791, %v1786
          %1796 = vst.msk [vmem:[%s320 + $0x20] sm:$0xff] %vm1791, %v1787
          %1797 = vst.msk [vmem:[%s320 + $0x28] sm:$0xff] %vm1791, %v1788
          %1798 = vst.msk [vmem:[%s320 + $0x30] sm:$0xff] %vm1791, %v1789
          %1799 = vst.msk [vmem:[%s320 + $0x38] sm:$0xff] %vm1791, %v1790
        $region52: #{bottleneck_forward.3} parent=43 // pred_fallthru
          _
        %s1800 = sand.u32 %s196, 1
        %s1801 = scalar_lea.sflag [#allocation4], %s1800
        %s1802 = sand.u32 %s196, 1
        %s1803 = smul.addr %s1802, 64
        %s1804 = scalar_lea.vmem [#allocation3], %s1803
        // Predicated region
        $region53: #{bottleneck_forward.3} parent=43 // pred_check
          %p1805 = pneg %p206
        $region54: #{bottleneck_forward.3} parent=43 // pred_check_branch
          %1807 = sbr.rel (%p1805) target = $region56
        $region55: #{bottleneck_forward.3} parent=43 // pred_region
          %s1809 = ssub.s32 1024, 1024
          %1810 = vsyncadd %s1801, %s1809
          %s1811 = smul.addr %s26, 8
          %s1812 = smul.addr %s25, 32
          %s1813 = sadd.s32 %s1811, %s1812
          %s1814 = smul.addr %s1813, 128
          %s1815 = scalar_lea.hbm %s6, %s1814
          %s1816 = sshll.u32 %s1804, 4
          %s1817 = int_to_ptr.vmem [resolvable:$true] %s1816
          %1822 = dma.vmem_to_hbm [thread:$0]  %s1817, 1024, %s1815, %s1801, 128, 128, 8
        $region56: #{bottleneck_forward.3} parent=43 // pred_fallthru
          _
      $region44: #{bottleneck_forward.3} parent=5 // pred_fallthru
        _
      %p1823 = scmp.le.s32.totalorder 2, %s15
      // Predicated region
      $region57: #{bottleneck_forward.3} parent=5 // pred_check
        %p1824 = pneg %p1823
      $region58: #{bottleneck_forward.3} parent=5 // pred_check_branch
        %1826 = sbr.rel (%p1824) target = $region60
      $region59: #{bottleneck_forward.3} parent=5 // pred_region
        %s1827 = ssub.s32 %s15, 2
        // Predicated region
        $region61: #{bottleneck_forward.3} parent=59 // pred_check
          %p1828 = pneg %p212
        $region62: #{bottleneck_forward.3} parent=59 // pred_check_branch
          %1830 = sbr.rel (%p1828) target = $region64
        $region63: #{bottleneck_forward.3} parent=59 // pred_region
          %s1831 = sand.u32 %s197, 1
          %s1832 = scalar_lea.sflag [#allocation4], %s1831
          %s1833 = sand.u32 %s197, 1
          %s1834 = smul.addr %s1833, 64
          %s1835 = scalar_lea.vmem [#allocation3], %s1834
          %1836 = dma.done %s1832, 1024
        $region64: #{bottleneck_forward.3} parent=59 // pred_fallthru
          _
      $region60: #{bottleneck_forward.3} parent=5 // pred_fallthru
        _
    $region6: #{bottleneck_forward.3} parent=1 // loop_footer
      %s19 = sadd.s32 1, %s15
    $region7: #{bottleneck_forward.3} parent=1 // loop_footer_branch
      %14 = sbr.rel target = $region3
    $region8: #{bottleneck_forward.3} parent=1 // loop_exit
      _
    %1837 = vsyncpa [#allocation4], 1
    %s1838 = scalar_lea.sflag [#allocation4], 1
    %1839 = vsyncpa %s1838, 1

</llo_original>
